<compile_context>
chip_gen: v7x
topology: tpu7x:2x2x1
jax: 0.10.0
libtpu: 0.0.40
codegen_flags: <defaults>
</compile_context>

<pallas_src>
from functools import partial

import jax
import jax.numpy as jnp
from jax.experimental import pallas as pl
from jax.experimental.pallas import tpu as pltpu


def _q_transform_kernel(x_ref, o_ref, *, scaling, num_heads, head_dim, kb, embed_dim):
    # x_ref: (tn, kb*E)        lane-dense: rows = seq positions of this tile,
    #                          columns = the embeds of `kb` batch elements.
    # o_ref: (kb, H, tn, D)    output block for the same (batch-group, seq-tile).
    for bi in range(kb):                     # small static unroll (kb*H <= 64)
        base = bi * embed_dim
        for h in range(num_heads):
            lo = base + h * head_dim
            # Fused load / scale / cast / store per head: never materializes a
            # full scaled (tn, kb*E) tile (which would bust the 64-vreg file).
            o_ref[bi, h, :, :] = (x_ref[:, lo:lo + head_dim] * scaling).astype(o_ref.dtype)


def _choose_tiling(n, b, e, num_heads, head_dim, itemsize, budget_bytes):
    """Pick (seq tile tn, #seq tiles, batch-group kb) for fat, budget-bounded steps."""
    d_pad = -(-head_dim // 128) * 128        # output VMEM tiles are lane-padded to 128

    def step_bytes(kb, tn):
        # double-buffered input block + double-buffered (lane-padded) output block
        return 2 * kb * tn * (e + num_heads * d_pad) * itemsize

    # 1) Sequence tile: take the whole sequence if it fits the budget with kb=1
    #    (a block dim equal to the full array dim needs no 8-alignment).
    cap = max(8, budget_bytes // max(step_bytes(1, 1), 1))
    if n <= cap:
        tn = n
    else:
        tn = max(8, (min(cap, n) // 8) * 8)
    n_seq = -(-n // tn)

    # 2) Guarantee enough grid points for v7x's 2 TensorCores + pipelining.
    target_steps = 4
    if b * n_seq < target_steps and n >= 16:
        n_seq = min(max(n // 8, 1), -(-target_steps // b))
        tn = -(-n // n_seq)
        if tn < n:
            tn = max(8, ((tn + 7) // 8) * 8)
        n_seq = -(-n // tn)

    # 3) Batch grouping: fatten each step while staying inside the VMEM budget
    #    and keeping >= target_steps (or the max possible) grid points.
    min_steps = max(2, min(target_steps, b * n_seq))
    kb = 1
    for cand in range(2, b + 1):
        if cand * num_heads > 64:            # cap static unroll length in-kernel
            break
        if step_bytes(cand, tn) > budget_bytes:
            break
        if (-(-b // cand)) * n_seq < min_steps:
            break
        kb = cand
    # Prefer an exact divisor of b (no ragged batch group) when close to the max.
    for d in range(kb, 0, -1):
        if b % d == 0:
            if 2 * d >= kb:
                kb = d
            break
    return tn, n_seq, kb


def q_transform(x, *, num_heads, head_dim, scaling):
    """x: (n, b, E) with E == num_heads * head_dim -> (b*num_heads, n, head_dim)."""
    n, b, e = x.shape
    assert e == num_heads * head_dim, "embed dim must equal num_heads * head_dim"
    assert e % 128 == 0, "embed dim must be a multiple of 128 for lane-dense loads"
    # TODO(synk): if this feeds a Pallas attention kernel, fold `scaling` into the
    # Q@K^T matmul and absorb this (n,b,E)->(b*H,n,D) permutation into that
    # kernel's Q BlockSpec index_map; this op is a pure HBM round trip otherwise.

    itemsize = jnp.dtype(x.dtype).itemsize
    try:
        vmem_cap = int(pltpu.get_tpu_info().vmem_capacity_bytes)
    except Exception:
        vmem_cap = 64 * 1024 * 1024
    # Per-step block budget (incl. Pallas double buffering):
    # ~16 MiB on v5e/v6e (128 MiB physical VMEM), ~12 MiB on v7x (64 MiB).
    budget = max(4 << 20, min(16 << 20, vmem_cap // 5))

    tn, n_seq, kb = _choose_tiling(n, b, e, num_heads, head_dim, itemsize, budget)
    n_bg = -(-b // kb)

    # Free contiguous view: column block bi of x2 is exactly batch bi's embed slab.
    x2 = x.reshape(n, b * e)

    out4 = pl.pallas_call(
        partial(_q_transform_kernel, scaling=scaling, num_heads=num_heads,
                head_dim=head_dim, kb=kb, embed_dim=e),
        out_shape=jax.ShapeDtypeStruct((b, num_heads, n, head_dim), x.dtype),
        grid=(n_bg, n_seq),
        in_specs=[
            pl.BlockSpec((tn, kb * e), lambda bg, si: (si, bg)),
        ],
        out_specs=pl.BlockSpec((kb, num_heads, tn, head_dim),
                               lambda bg, si: (bg, 0, si, 0)),
        compiler_params=pltpu.CompilerParams(
            dimension_semantics=("parallel", "parallel"),
            vmem_limit_bytes=32 * 1024 * 1024),
    )(x2)

    # Free collapse: (b, H, n, D) -> (b*H, n, D), matching
    # PyTorch's view(n, b*H, D).transpose(0, 1).
    return out4.reshape(b * num_heads, n, head_dim)


def _reference(x, *, num_heads, head_dim, scaling):
    n, b, _ = x.shape
    return jnp.swapaxes((x * scaling).reshape(n, b * num_heads, head_dim), 0, 1)


if __name__ == "__main__":
    num_heads, head_dim = 4, 32
    embed_dim = num_heads * head_dim              # 128, as in the spec
    scaling = head_dim ** -0.5
    key = jax.random.PRNGKey(0)
    k1, k2 = jax.random.split(key)

    # Spec-sized input (65, 32, 128): ragged seq length, batch-grouped grid.
    x = jax.random.normal(k1, (65, 32, embed_dim), dtype=jnp.float32)
    out = jax.block_until_ready(
        q_transform(x, num_heads=num_heads, head_dim=head_dim, scaling=scaling))
    ref = _reference(x, num_heads=num_heads, head_dim=head_dim, scaling=scaling)
    assert out.shape == (32 * num_heads, 65, head_dim), out.shape
    assert jnp.allclose(out, ref, atol=1e-6, rtol=1e-6)

    # b == 1 case: exercises the forced sequence split (>= 2 grid points).
    x1 = jax.random.normal(k2, (64, 1, embed_dim), dtype=jnp.float32)
    out1 = jax.block_until_ready(
        q_transform(x1, num_heads=num_heads, head_dim=head_dim, scaling=scaling))
    ref1 = _reference(x1, num_heads=num_heads, head_dim=head_dim, scaling=scaling)
    assert out1.shape == (1 * num_heads, 64, head_dim), out1.shape
    assert jnp.allclose(out1, ref1, atol=1e-6, rtol=1e-6)

    print("KERNEL_OK")
</pallas_src>

<mosaic_0001>
module attributes {stable_mosaic.version = 11 : i64} {
  func.func @_q_transform_kernel(%arg0: i32, %arg1: i32, %arg2: memref<65x1024xf32, #tpu.memory_space<vmem>>, %arg3: memref<8x4x65x32xf32, #tpu.memory_space<vmem>>) attributes {dimension_semantics = [#tpu.dimension_semantics<parallel>, #tpu.dimension_semantics<parallel>], iteration_bounds = array<i64: 4, 1>, scalar_prefetch = 0 : i64, scratch_operands = 0 : i64, tpu.core_type = #tpu.core_type<tc>, window_params = [{transform_indices = @transform_0, window_bounds = array<i64: 65, 1024>}, {transform_indices = @transform_1, window_bounds = array<i64: 8, 4, 65, 32>}]} {
    %c0 = arith.constant 0 : index
    %c0_0 = arith.constant 0 : index
    %0 = vector.load %arg2[%c0, %c0_0] : memref<65x1024xf32, #tpu.memory_space<vmem>>, vector<65x32xf32>
    %cst = arith.constant 0.176776692 : f32
    %1 = vector.broadcast %cst : f32 to vector<65x32xf32>
    %2 = arith.mulf %0, %1 : vector<65x32xf32>
    %c0_1 = arith.constant 0 : index
    %c0_2 = arith.constant 0 : index
    %c0_3 = arith.constant 0 : index
    %c0_4 = arith.constant 0 : index
    %3 = vector.load %arg3[%c0_1, %c0_2, %c0_3, %c0_4] : memref<8x4x65x32xf32, #tpu.memory_space<vmem>>, vector<1x1x65x32xf32>
    %4 = vector.shape_cast %3 : vector<1x1x65x32xf32> to vector<65x32xf32>
    %5 = vector.shape_cast %2 : vector<65x32xf32> to vector<1x1x65x32xf32>
    tpu.vector_store %arg3[%c0_1, %c0_2, %c0_3, %c0_4], %5 {strides = array<i32>} : memref<8x4x65x32xf32, #tpu.memory_space<vmem>>, vector<1x1x65x32xf32>,
    %c0_5 = arith.constant 0 : index
    %c32 = arith.constant 32 : index
    %6 = vector.load %arg2[%c0_5, %c32] : memref<65x1024xf32, #tpu.memory_space<vmem>>, vector<65x32xf32>
    %cst_6 = arith.constant 0.176776692 : f32
    %7 = vector.broadcast %cst_6 : f32 to vector<65x32xf32>
    %8 = arith.mulf %6, %7 : vector<65x32xf32>
    %c0_7 = arith.constant 0 : index
    %c1 = arith.constant 1 : index
    %c0_8 = arith.constant 0 : index
    %c0_9 = arith.constant 0 : index
    %9 = vector.load %arg3[%c0_7, %c1, %c0_8, %c0_9] : memref<8x4x65x32xf32, #tpu.memory_space<vmem>>, vector<1x1x65x32xf32>
    %10 = vector.shape_cast %9 : vector<1x1x65x32xf32> to vector<65x32xf32>
    %11 = vector.shape_cast %8 : vector<65x32xf32> to vector<1x1x65x32xf32>
    tpu.vector_store %arg3[%c0_7, %c1, %c0_8, %c0_9], %11 {strides = array<i32>} : memref<8x4x65x32xf32, #tpu.memory_space<vmem>>, vector<1x1x65x32xf32>,
    %c0_10 = arith.constant 0 : index
    %c64 = arith.constant 64 : index
    %12 = vector.load %arg2[%c0_10, %c64] : memref<65x1024xf32, #tpu.memory_space<vmem>>, vector<65x32xf32>
    %cst_11 = arith.constant 0.176776692 : f32
    %13 = vector.broadcast %cst_11 : f32 to vector<65x32xf32>
    %14 = arith.mulf %12, %13 : vector<65x32xf32>
    %c0_12 = arith.constant 0 : index
    %c2 = arith.constant 2 : index
    %c0_13 = arith.constant 0 : index
    %c0_14 = arith.constant 0 : index
    %15 = vector.load %arg3[%c0_12, %c2, %c0_13, %c0_14] : memref<8x4x65x32xf32, #tpu.memory_space<vmem>>, vector<1x1x65x32xf32>
    %16 = vector.shape_cast %15 : vector<1x1x65x32xf32> to vector<65x32xf32>
    %17 = vector.shape_cast %14 : vector<65x32xf32> to vector<1x1x65x32xf32>
    tpu.vector_store %arg3[%c0_12, %c2, %c0_13, %c0_14], %17 {strides = array<i32>} : memref<8x4x65x32xf32, #tpu.memory_space<vmem>>, vector<1x1x65x32xf32>,
    %c0_15 = arith.constant 0 : index
    %c96 = arith.constant 96 : index
    %18 = vector.load %arg2[%c0_15, %c96] : memref<65x1024xf32, #tpu.memory_space<vmem>>, vector<65x32xf32>
    %cst_16 = arith.constant 0.176776692 : f32
    %19 = vector.broadcast %cst_16 : f32 to vector<65x32xf32>
    %20 = arith.mulf %18, %19 : vector<65x32xf32>
    %c0_17 = arith.constant 0 : index
    %c3 = arith.constant 3 : index
    %c0_18 = arith.constant 0 : index
    %c0_19 = arith.constant 0 : index
    %21 = vector.load %arg3[%c0_17, %c3, %c0_18, %c0_19] : memref<8x4x65x32xf32, #tpu.memory_space<vmem>>, vector<1x1x65x32xf32>
    %22 = vector.shape_cast %21 : vector<1x1x65x32xf32> to vector<65x32xf32>
    %23 = vector.shape_cast %20 : vector<65x32xf32> to vector<1x1x65x32xf32>
    tpu.vector_store %arg3[%c0_17, %c3, %c0_18, %c0_19], %23 {strides = array<i32>} : memref<8x4x65x32xf32, #tpu.memory_space<vmem>>, vector<1x1x65x32xf32>,
    %c0_20 = arith.constant 0 : index
    %c128 = arith.constant 128 : index
    %24 = vector.load %arg2[%c0_20, %c128] : memref<65x1024xf32, #tpu.memory_space<vmem>>, vector<65x32xf32>
    %cst_21 = arith.constant 0.176776692 : f32
    %25 = vector.broadcast %cst_21 : f32 to vector<65x32xf32>
    %26 = arith.mulf %24, %25 : vector<65x32xf32>
    %c1_22 = arith.constant 1 : index
    %c0_23 = arith.constant 0 : index
    %c0_24 = arith.constant 0 : index
    %c0_25 = arith.constant 0 : index
    %27 = vector.load %arg3[%c1_22, %c0_23, %c0_24, %c0_25] : memref<8x4x65x32xf32, #tpu.memory_space<vmem>>, vector<1x1x65x32xf32>
    %28 = vector.shape_cast %27 : vector<1x1x65x32xf32> to vector<65x32xf32>
    %29 = vector.shape_cast %26 : vector<65x32xf32> to vector<1x1x65x32xf32>
    tpu.vector_store %arg3[%c1_22, %c0_23, %c0_24, %c0_25], %29 {strides = array<i32>} : memref<8x4x65x32xf32, #tpu.memory_space<vmem>>, vector<1x1x65x32xf32>,
    %c0_26 = arith.constant 0 : index
    %c160 = arith.constant 160 : index
    %30 = vector.load %arg2[%c0_26, %c160] : memref<65x1024xf32, #tpu.memory_space<vmem>>, vector<65x32xf32>
    %cst_27 = arith.constant 0.176776692 : f32
    %31 = vector.broadcast %cst_27 : f32 to vector<65x32xf32>
    %32 = arith.mulf %30, %31 : vector<65x32xf32>
    %c1_28 = arith.constant 1 : index
    %c1_29 = arith.constant 1 : index
    %c0_30 = arith.constant 0 : index
    %c0_31 = arith.constant 0 : index
    %33 = vector.load %arg3[%c1_28, %c1_29, %c0_30, %c0_31] : memref<8x4x65x32xf32, #tpu.memory_space<vmem>>, vector<1x1x65x32xf32>
    %34 = vector.shape_cast %33 : vector<1x1x65x32xf32> to vector<65x32xf32>
    %35 = vector.shape_cast %32 : vector<65x32xf32> to vector<1x1x65x32xf32>
    tpu.vector_store %arg3[%c1_28, %c1_29, %c0_30, %c0_31], %35 {strides = array<i32>} : memref<8x4x65x32xf32, #tpu.memory_space<vmem>>, vector<1x1x65x32xf32>,
    %c0_32 = arith.constant 0 : index
    %c192 = arith.constant 192 : index
    %36 = vector.load %arg2[%c0_32, %c192] : memref<65x1024xf32, #tpu.memory_space<vmem>>, vector<65x32xf32>
    %cst_33 = arith.constant 0.176776692 : f32
    %37 = vector.broadcast %cst_33 : f32 to vector<65x32xf32>
    %38 = arith.mulf %36, %37 : vector<65x32xf32>
    %c1_34 = arith.constant 1 : index
    %c2_35 = arith.constant 2 : index
    %c0_36 = arith.constant 0 : index
    %c0_37 = arith.constant 0 : index
    %39 = vector.load %arg3[%c1_34, %c2_35, %c0_36, %c0_37] : memref<8x4x65x32xf32, #tpu.memory_space<vmem>>, vector<1x1x65x32xf32>
    %40 = vector.shape_cast %39 : vector<1x1x65x32xf32> to vector<65x32xf32>
    %41 = vector.shape_cast %38 : vector<65x32xf32> to vector<1x1x65x32xf32>
    tpu.vector_store %arg3[%c1_34, %c2_35, %c0_36, %c0_37], %41 {strides = array<i32>} : memref<8x4x65x32xf32, #tpu.memory_space<vmem>>, vector<1x1x65x32xf32>,
    %c0_38 = arith.constant 0 : index
    %c224 = arith.constant 224 : index
    %42 = vector.load %arg2[%c0_38, %c224] : memref<65x1024xf32, #tpu.memory_space<vmem>>, vector<65x32xf32>
    %cst_39 = arith.constant 0.176776692 : f32
    %43 = vector.broadcast %cst_39 : f32 to vector<65x32xf32>
    %44 = arith.mulf %42, %43 : vector<65x32xf32>
    %c1_40 = arith.constant 1 : index
    %c3_41 = arith.constant 3 : index
    %c0_42 = arith.constant 0 : index
    %c0_43 = arith.constant 0 : index
    %45 = vector.load %arg3[%c1_40, %c3_41, %c0_42, %c0_43] : memref<8x4x65x32xf32, #tpu.memory_space<vmem>>, vector<1x1x65x32xf32>
    %46 = vector.shape_cast %45 : vector<1x1x65x32xf32> to vector<65x32xf32>
    %47 = vector.shape_cast %44 : vector<65x32xf32> to vector<1x1x65x32xf32>
    tpu.vector_store %arg3[%c1_40, %c3_41, %c0_42, %c0_43], %47 {strides = array<i32>} : memref<8x4x65x32xf32, #tpu.memory_space<vmem>>, vector<1x1x65x32xf32>,
    %c0_44 = arith.constant 0 : index
    %c256 = arith.constant 256 : index
    %48 = vector.load %arg2[%c0_44, %c256] : memref<65x1024xf32, #tpu.memory_space<vmem>>, vector<65x32xf32>
    %cst_45 = arith.constant 0.176776692 : f32
    %49 = vector.broadcast %cst_45 : f32 to vector<65x32xf32>
    %50 = arith.mulf %48, %49 : vector<65x32xf32>
    %c2_46 = arith.constant 2 : index
    %c0_47 = arith.constant 0 : index
    %c0_48 = arith.constant 0 : index
    %c0_49 = arith.constant 0 : index
    %51 = vector.load %arg3[%c2_46, %c0_47, %c0_48, %c0_49] : memref<8x4x65x32xf32, #tpu.memory_space<vmem>>, vector<1x1x65x32xf32>
    %52 = vector.shape_cast %51 : vector<1x1x65x32xf32> to vector<65x32xf32>
    %53 = vector.shape_cast %50 : vector<65x32xf32> to vector<1x1x65x32xf32>
    tpu.vector_store %arg3[%c2_46, %c0_47, %c0_48, %c0_49], %53 {strides = array<i32>} : memref<8x4x65x32xf32, #tpu.memory_space<vmem>>, vector<1x1x65x32xf32>,
    %c0_50 = arith.constant 0 : index
    %c288 = arith.constant 288 : index
    %54 = vector.load %arg2[%c0_50, %c288] : memref<65x1024xf32, #tpu.memory_space<vmem>>, vector<65x32xf32>
    %cst_51 = arith.constant 0.176776692 : f32
    %55 = vector.broadcast %cst_51 : f32 to vector<65x32xf32>
    %56 = arith.mulf %54, %55 : vector<65x32xf32>
    %c2_52 = arith.constant 2 : index
    %c1_53 = arith.constant 1 : index
    %c0_54 = arith.constant 0 : index
    %c0_55 = arith.constant 0 : index
    %57 = vector.load %arg3[%c2_52, %c1_53, %c0_54, %c0_55] : memref<8x4x65x32xf32, #tpu.memory_space<vmem>>, vector<1x1x65x32xf32>
    %58 = vector.shape_cast %57 : vector<1x1x65x32xf32> to vector<65x32xf32>
    %59 = vector.shape_cast %56 : vector<65x32xf32> to vector<1x1x65x32xf32>
    tpu.vector_store %arg3[%c2_52, %c1_53, %c0_54, %c0_55], %59 {strides = array<i32>} : memref<8x4x65x32xf32, #tpu.memory_space<vmem>>, vector<1x1x65x32xf32>,
    %c0_56 = arith.constant 0 : index
    %c320 = arith.constant 320 : index
    %60 = vector.load %arg2[%c0_56, %c320] : memref<65x1024xf32, #tpu.memory_space<vmem>>, vector<65x32xf32>
    %cst_57 = arith.constant 0.176776692 : f32
    %61 = vector.broadcast %cst_57 : f32 to vector<65x32xf32>
    %62 = arith.mulf %60, %61 : vector<65x32xf32>
    %c2_58 = arith.constant 2 : index
    %c2_59 = arith.constant 2 : index
    %c0_60 = arith.constant 0 : index
    %c0_61 = arith.constant 0 : index
    %63 = vector.load %arg3[%c2_58, %c2_59, %c0_60, %c0_61] : memref<8x4x65x32xf32, #tpu.memory_space<vmem>>, vector<1x1x65x32xf32>
    %64 = vector.shape_cast %63 : vector<1x1x65x32xf32> to vector<65x32xf32>
    %65 = vector.shape_cast %62 : vector<65x32xf32> to vector<1x1x65x32xf32>
    tpu.vector_store %arg3[%c2_58, %c2_59, %c0_60, %c0_61], %65 {strides = array<i32>} : memref<8x4x65x32xf32, #tpu.memory_space<vmem>>, vector<1x1x65x32xf32>,
    %c0_62 = arith.constant 0 : index
    %c352 = arith.constant 352 : index
    %66 = vector.load %arg2[%c0_62, %c352] : memref<65x1024xf32, #tpu.memory_space<vmem>>, vector<65x32xf32>
    %cst_63 = arith.constant 0.176776692 : f32
    %67 = vector.broadcast %cst_63 : f32 to vector<65x32xf32>
    %68 = arith.mulf %66, %67 : vector<65x32xf32>
    %c2_64 = arith.constant 2 : index
    %c3_65 = arith.constant 3 : index
    %c0_66 = arith.constant 0 : index
    %c0_67 = arith.constant 0 : index
    %69 = vector.load %arg3[%c2_64, %c3_65, %c0_66, %c0_67] : memref<8x4x65x32xf32, #tpu.memory_space<vmem>>, vector<1x1x65x32xf32>
    %70 = vector.shape_cast %69 : vector<1x1x65x32xf32> to vector<65x32xf32>
    %71 = vector.shape_cast %68 : vector<65x32xf32> to vector<1x1x65x32xf32>
    tpu.vector_store %arg3[%c2_64, %c3_65, %c0_66, %c0_67], %71 {strides = array<i32>} : memref<8x4x65x32xf32, #tpu.memory_space<vmem>>, vector<1x1x65x32xf32>,
    %c0_68 = arith.constant 0 : index
    %c384 = arith.constant 384 : index
    %72 = vector.load %arg2[%c0_68, %c384] : memref<65x1024xf32, #tpu.memory_space<vmem>>, vector<65x32xf32>
    %cst_69 = arith.constant 0.176776692 : f32
    %73 = vector.broadcast %cst_69 : f32 to vector<65x32xf32>
    %74 = arith.mulf %72, %73 : vector<65x32xf32>
    %c3_70 = arith.constant 3 : index
    %c0_71 = arith.constant 0 : index
    %c0_72 = arith.constant 0 : index
    %c0_73 = arith.constant 0 : index
    %75 = vector.load %arg3[%c3_70, %c0_71, %c0_72, %c0_73] : memref<8x4x65x32xf32, #tpu.memory_space<vmem>>, vector<1x1x65x32xf32>
    %76 = vector.shape_cast %75 : vector<1x1x65x32xf32> to vector<65x32xf32>
    %77 = vector.shape_cast %74 : vector<65x32xf32> to vector<1x1x65x32xf32>
    tpu.vector_store %arg3[%c3_70, %c0_71, %c0_72, %c0_73], %77 {strides = array<i32>} : memref<8x4x65x32xf32, #tpu.memory_space<vmem>>, vector<1x1x65x32xf32>,
    %c0_74 = arith.constant 0 : index
    %c416 = arith.constant 416 : index
    %78 = vector.load %arg2[%c0_74, %c416] : memref<65x1024xf32, #tpu.memory_space<vmem>>, vector<65x32xf32>
    %cst_75 = arith.constant 0.176776692 : f32
    %79 = vector.broadcast %cst_75 : f32 to vector<65x32xf32>
    %80 = arith.mulf %78, %79 : vector<65x32xf32>
    %c3_76 = arith.constant 3 : index
    %c1_77 = arith.constant 1 : index
    %c0_78 = arith.constant 0 : index
    %c0_79 = arith.constant 0 : index
    %81 = vector.load %arg3[%c3_76, %c1_77, %c0_78, %c0_79] : memref<8x4x65x32xf32, #tpu.memory_space<vmem>>, vector<1x1x65x32xf32>
    %82 = vector.shape_cast %81 : vector<1x1x65x32xf32> to vector<65x32xf32>
    %83 = vector.shape_cast %80 : vector<65x32xf32> to vector<1x1x65x32xf32>
    tpu.vector_store %arg3[%c3_76, %c1_77, %c0_78, %c0_79], %83 {strides = array<i32>} : memref<8x4x65x32xf32, #tpu.memory_space<vmem>>, vector<1x1x65x32xf32>,
    %c0_80 = arith.constant 0 : index
    %c448 = arith.constant 448 : index
    %84 = vector.load %arg2[%c0_80, %c448] : memref<65x1024xf32, #tpu.memory_space<vmem>>, vector<65x32xf32>
    %cst_81 = arith.constant 0.176776692 : f32
    %85 = vector.broadcast %cst_81 : f32 to vector<65x32xf32>
    %86 = arith.mulf %84, %85 : vector<65x32xf32>
    %c3_82 = arith.constant 3 : index
    %c2_83 = arith.constant 2 : index
    %c0_84 = arith.constant 0 : index
    %c0_85 = arith.constant 0 : index
    %87 = vector.load %arg3[%c3_82, %c2_83, %c0_84, %c0_85] : memref<8x4x65x32xf32, #tpu.memory_space<vmem>>, vector<1x1x65x32xf32>
    %88 = vector.shape_cast %87 : vector<1x1x65x32xf32> to vector<65x32xf32>
    %89 = vector.shape_cast %86 : vector<65x32xf32> to vector<1x1x65x32xf32>
    tpu.vector_store %arg3[%c3_82, %c2_83, %c0_84, %c0_85], %89 {strides = array<i32>} : memref<8x4x65x32xf32, #tpu.memory_space<vmem>>, vector<1x1x65x32xf32>,
    %c0_86 = arith.constant 0 : index
    %c480 = arith.constant 480 : index
    %90 = vector.load %arg2[%c0_86, %c480] : memref<65x1024xf32, #tpu.memory_space<vmem>>, vector<65x32xf32>
    %cst_87 = arith.constant 0.176776692 : f32
    %91 = vector.broadcast %cst_87 : f32 to vector<65x32xf32>
    %92 = arith.mulf %90, %91 : vector<65x32xf32>
    %c3_88 = arith.constant 3 : index
    %c3_89 = arith.constant 3 : index
    %c0_90 = arith.constant 0 : index
    %c0_91 = arith.constant 0 : index
    %93 = vector.load %arg3[%c3_88, %c3_89, %c0_90, %c0_91] : memref<8x4x65x32xf32, #tpu.memory_space<vmem>>, vector<1x1x65x32xf32>
    %94 = vector.shape_cast %93 : vector<1x1x65x32xf32> to vector<65x32xf32>
    %95 = vector.shape_cast %92 : vector<65x32xf32> to vector<1x1x65x32xf32>
    tpu.vector_store %arg3[%c3_88, %c3_89, %c0_90, %c0_91], %95 {strides = array<i32>} : memref<8x4x65x32xf32, #tpu.memory_space<vmem>>, vector<1x1x65x32xf32>,
    %c0_92 = arith.constant 0 : index
    %c512 = arith.constant 512 : index
    %96 = vector.load %arg2[%c0_92, %c512] : memref<65x1024xf32, #tpu.memory_space<vmem>>, vector<65x32xf32>
    %cst_93 = arith.constant 0.176776692 : f32
    %97 = vector.broadcast %cst_93 : f32 to vector<65x32xf32>
    %98 = arith.mulf %96, %97 : vector<65x32xf32>
    %c4 = arith.constant 4 : index
    %c0_94 = arith.constant 0 : index
    %c0_95 = arith.constant 0 : index
    %c0_96 = arith.constant 0 : index
    %99 = vector.load %arg3[%c4, %c0_94, %c0_95, %c0_96] : memref<8x4x65x32xf32, #tpu.memory_space<vmem>>, vector<1x1x65x32xf32>
    %100 = vector.shape_cast %99 : vector<1x1x65x32xf32> to vector<65x32xf32>
    %101 = vector.shape_cast %98 : vector<65x32xf32> to vector<1x1x65x32xf32>
    tpu.vector_store %arg3[%c4, %c0_94, %c0_95, %c0_96], %101 {strides = array<i32>} : memref<8x4x65x32xf32, #tpu.memory_space<vmem>>, vector<1x1x65x32xf32>,
    %c0_97 = arith.constant 0 : index
    %c544 = arith.constant 544 : index
    %102 = vector.load %arg2[%c0_97, %c544] : memref<65x1024xf32, #tpu.memory_space<vmem>>, vector<65x32xf32>
    %cst_98 = arith.constant 0.176776692 : f32
    %103 = vector.broadcast %cst_98 : f32 to vector<65x32xf32>
    %104 = arith.mulf %102, %103 : vector<65x32xf32>
    %c4_99 = arith.constant 4 : index
    %c1_100 = arith.constant 1 : index
    %c0_101 = arith.constant 0 : index
    %c0_102 = arith.constant 0 : index
    %105 = vector.load %arg3[%c4_99, %c1_100, %c0_101, %c0_102] : memref<8x4x65x32xf32, #tpu.memory_space<vmem>>, vector<1x1x65x32xf32>
    %106 = vector.shape_cast %105 : vector<1x1x65x32xf32> to vector<65x32xf32>
    %107 = vector.shape_cast %104 : vector<65x32xf32> to vector<1x1x65x32xf32>
    tpu.vector_store %arg3[%c4_99, %c1_100, %c0_101, %c0_102], %107 {strides = array<i32>} : memref<8x4x65x32xf32, #tpu.memory_space<vmem>>, vector<1x1x65x32xf32>,
    %c0_103 = arith.constant 0 : index
    %c576 = arith.constant 576 : index
    %108 = vector.load %arg2[%c0_103, %c576] : memref<65x1024xf32, #tpu.memory_space<vmem>>, vector<65x32xf32>
    %cst_104 = arith.constant 0.176776692 : f32
    %109 = vector.broadcast %cst_104 : f32 to vector<65x32xf32>
    %110 = arith.mulf %108, %109 : vector<65x32xf32>
    %c4_105 = arith.constant 4 : index
    %c2_106 = arith.constant 2 : index
    %c0_107 = arith.constant 0 : index
    %c0_108 = arith.constant 0 : index
    %111 = vector.load %arg3[%c4_105, %c2_106, %c0_107, %c0_108] : memref<8x4x65x32xf32, #tpu.memory_space<vmem>>, vector<1x1x65x32xf32>
    %112 = vector.shape_cast %111 : vector<1x1x65x32xf32> to vector<65x32xf32>
    %113 = vector.shape_cast %110 : vector<65x32xf32> to vector<1x1x65x32xf32>
    tpu.vector_store %arg3[%c4_105, %c2_106, %c0_107, %c0_108], %113 {strides = array<i32>} : memref<8x4x65x32xf32, #tpu.memory_space<vmem>>, vector<1x1x65x32xf32>,
    %c0_109 = arith.constant 0 : index
    %c608 = arith.constant 608 : index
    %114 = vector.load %arg2[%c0_109, %c608] : memref<65x1024xf32, #tpu.memory_space<vmem>>, vector<65x32xf32>
    %cst_110 = arith.constant 0.176776692 : f32
    %115 = vector.broadcast %cst_110 : f32 to vector<65x32xf32>
    %116 = arith.mulf %114, %115 : vector<65x32xf32>
    %c4_111 = arith.constant 4 : index
    %c3_112 = arith.constant 3 : index
    %c0_113 = arith.constant 0 : index
    %c0_114 = arith.constant 0 : index
    %117 = vector.load %arg3[%c4_111, %c3_112, %c0_113, %c0_114] : memref<8x4x65x32xf32, #tpu.memory_space<vmem>>, vector<1x1x65x32xf32>
    %118 = vector.shape_cast %117 : vector<1x1x65x32xf32> to vector<65x32xf32>
    %119 = vector.shape_cast %116 : vector<65x32xf32> to vector<1x1x65x32xf32>
    tpu.vector_store %arg3[%c4_111, %c3_112, %c0_113, %c0_114], %119 {strides = array<i32>} : memref<8x4x65x32xf32, #tpu.memory_space<vmem>>, vector<1x1x65x32xf32>,
    %c0_115 = arith.constant 0 : index
    %c640 = arith.constant 640 : index
    %120 = vector.load %arg2[%c0_115, %c640] : memref<65x1024xf32, #tpu.memory_space<vmem>>, vector<65x32xf32>
    %cst_116 = arith.constant 0.176776692 : f32
    %121 = vector.broadcast %cst_116 : f32 to vector<65x32xf32>
    %122 = arith.mulf %120, %121 : vector<65x32xf32>
    %c5 = arith.constant 5 : index
    %c0_117 = arith.constant 0 : index
    %c0_118 = arith.constant 0 : index
    %c0_119 = arith.constant 0 : index
    %123 = vector.load %arg3[%c5, %c0_117, %c0_118, %c0_119] : memref<8x4x65x32xf32, #tpu.memory_space<vmem>>, vector<1x1x65x32xf32>
    %124 = vector.shape_cast %123 : vector<1x1x65x32xf32> to vector<65x32xf32>
    %125 = vector.shape_cast %122 : vector<65x32xf32> to vector<1x1x65x32xf32>
    tpu.vector_store %arg3[%c5, %c0_117, %c0_118, %c0_119], %125 {strides = array<i32>} : memref<8x4x65x32xf32, #tpu.memory_space<vmem>>, vector<1x1x65x32xf32>,
    %c0_120 = arith.constant 0 : index
    %c672 = arith.constant 672 : index
    %126 = vector.load %arg2[%c0_120, %c672] : memref<65x1024xf32, #tpu.memory_space<vmem>>, vector<65x32xf32>
    %cst_121 = arith.constant 0.176776692 : f32
    %127 = vector.broadcast %cst_121 : f32 to vector<65x32xf32>
    %128 = arith.mulf %126, %127 : vector<65x32xf32>
    %c5_122 = arith.constant 5 : index
    %c1_123 = arith.constant 1 : index
    %c0_124 = arith.constant 0 : index
    %c0_125 = arith.constant 0 : index
    %129 = vector.load %arg3[%c5_122, %c1_123, %c0_124, %c0_125] : memref<8x4x65x32xf32, #tpu.memory_space<vmem>>, vector<1x1x65x32xf32>
    %130 = vector.shape_cast %129 : vector<1x1x65x32xf32> to vector<65x32xf32>
    %131 = vector.shape_cast %128 : vector<65x32xf32> to vector<1x1x65x32xf32>
    tpu.vector_store %arg3[%c5_122, %c1_123, %c0_124, %c0_125], %131 {strides = array<i32>} : memref<8x4x65x32xf32, #tpu.memory_space<vmem>>, vector<1x1x65x32xf32>,
    %c0_126 = arith.constant 0 : index
    %c704 = arith.constant 704 : index
    %132 = vector.load %arg2[%c0_126, %c704] : memref<65x1024xf32, #tpu.memory_space<vmem>>, vector<65x32xf32>
    %cst_127 = arith.constant 0.176776692 : f32
    %133 = vector.broadcast %cst_127 : f32 to vector<65x32xf32>
    %134 = arith.mulf %132, %133 : vector<65x32xf32>
    %c5_128 = arith.constant 5 : index
    %c2_129 = arith.constant 2 : index
    %c0_130 = arith.constant 0 : index
    %c0_131 = arith.constant 0 : index
    %135 = vector.load %arg3[%c5_128, %c2_129, %c0_130, %c0_131] : memref<8x4x65x32xf32, #tpu.memory_space<vmem>>, vector<1x1x65x32xf32>
    %136 = vector.shape_cast %135 : vector<1x1x65x32xf32> to vector<65x32xf32>
    %137 = vector.shape_cast %134 : vector<65x32xf32> to vector<1x1x65x32xf32>
    tpu.vector_store %arg3[%c5_128, %c2_129, %c0_130, %c0_131], %137 {strides = array<i32>} : memref<8x4x65x32xf32, #tpu.memory_space<vmem>>, vector<1x1x65x32xf32>,
    %c0_132 = arith.constant 0 : index
    %c736 = arith.constant 736 : index
    %138 = vector.load %arg2[%c0_132, %c736] : memref<65x1024xf32, #tpu.memory_space<vmem>>, vector<65x32xf32>
    %cst_133 = arith.constant 0.176776692 : f32
    %139 = vector.broadcast %cst_133 : f32 to vector<65x32xf32>
    %140 = arith.mulf %138, %139 : vector<65x32xf32>
    %c5_134 = arith.constant 5 : index
    %c3_135 = arith.constant 3 : index
    %c0_136 = arith.constant 0 : index
    %c0_137 = arith.constant 0 : index
    %141 = vector.load %arg3[%c5_134, %c3_135, %c0_136, %c0_137] : memref<8x4x65x32xf32, #tpu.memory_space<vmem>>, vector<1x1x65x32xf32>
    %142 = vector.shape_cast %141 : vector<1x1x65x32xf32> to vector<65x32xf32>
    %143 = vector.shape_cast %140 : vector<65x32xf32> to vector<1x1x65x32xf32>
    tpu.vector_store %arg3[%c5_134, %c3_135, %c0_136, %c0_137], %143 {strides = array<i32>} : memref<8x4x65x32xf32, #tpu.memory_space<vmem>>, vector<1x1x65x32xf32>,
    %c0_138 = arith.constant 0 : index
    %c768 = arith.constant 768 : index
    %144 = vector.load %arg2[%c0_138, %c768] : memref<65x1024xf32, #tpu.memory_space<vmem>>, vector<65x32xf32>
    %cst_139 = arith.constant 0.176776692 : f32
    %145 = vector.broadcast %cst_139 : f32 to vector<65x32xf32>
    %146 = arith.mulf %144, %145 : vector<65x32xf32>
    %c6 = arith.constant 6 : index
    %c0_140 = arith.constant 0 : index
    %c0_141 = arith.constant 0 : index
    %c0_142 = arith.constant 0 : index
    %147 = vector.load %arg3[%c6, %c0_140, %c0_141, %c0_142] : memref<8x4x65x32xf32, #tpu.memory_space<vmem>>, vector<1x1x65x32xf32>
    %148 = vector.shape_cast %147 : vector<1x1x65x32xf32> to vector<65x32xf32>
    %149 = vector.shape_cast %146 : vector<65x32xf32> to vector<1x1x65x32xf32>
    tpu.vector_store %arg3[%c6, %c0_140, %c0_141, %c0_142], %149 {strides = array<i32>} : memref<8x4x65x32xf32, #tpu.memory_space<vmem>>, vector<1x1x65x32xf32>,
    %c0_143 = arith.constant 0 : index
    %c800 = arith.constant 800 : index
    %150 = vector.load %arg2[%c0_143, %c800] : memref<65x1024xf32, #tpu.memory_space<vmem>>, vector<65x32xf32>
    %cst_144 = arith.constant 0.176776692 : f32
    %151 = vector.broadcast %cst_144 : f32 to vector<65x32xf32>
    %152 = arith.mulf %150, %151 : vector<65x32xf32>
    %c6_145 = arith.constant 6 : index
    %c1_146 = arith.constant 1 : index
    %c0_147 = arith.constant 0 : index
    %c0_148 = arith.constant 0 : index
    %153 = vector.load %arg3[%c6_145, %c1_146, %c0_147, %c0_148] : memref<8x4x65x32xf32, #tpu.memory_space<vmem>>, vector<1x1x65x32xf32>
    %154 = vector.shape_cast %153 : vector<1x1x65x32xf32> to vector<65x32xf32>
    %155 = vector.shape_cast %152 : vector<65x32xf32> to vector<1x1x65x32xf32>
    tpu.vector_store %arg3[%c6_145, %c1_146, %c0_147, %c0_148], %155 {strides = array<i32>} : memref<8x4x65x32xf32, #tpu.memory_space<vmem>>, vector<1x1x65x32xf32>,
    %c0_149 = arith.constant 0 : index
    %c832 = arith.constant 832 : index
    %156 = vector.load %arg2[%c0_149, %c832] : memref<65x1024xf32, #tpu.memory_space<vmem>>, vector<65x32xf32>
    %cst_150 = arith.constant 0.176776692 : f32
    %157 = vector.broadcast %cst_150 : f32 to vector<65x32xf32>
    %158 = arith.mulf %156, %157 : vector<65x32xf32>
    %c6_151 = arith.constant 6 : index
    %c2_152 = arith.constant 2 : index
    %c0_153 = arith.constant 0 : index
    %c0_154 = arith.constant 0 : index
    %159 = vector.load %arg3[%c6_151, %c2_152, %c0_153, %c0_154] : memref<8x4x65x32xf32, #tpu.memory_space<vmem>>, vector<1x1x65x32xf32>
    %160 = vector.shape_cast %159 : vector<1x1x65x32xf32> to vector<65x32xf32>
    %161 = vector.shape_cast %158 : vector<65x32xf32> to vector<1x1x65x32xf32>
    tpu.vector_store %arg3[%c6_151, %c2_152, %c0_153, %c0_154], %161 {strides = array<i32>} : memref<8x4x65x32xf32, #tpu.memory_space<vmem>>, vector<1x1x65x32xf32>,
    %c0_155 = arith.constant 0 : index
    %c864 = arith.constant 864 : index
    %162 = vector.load %arg2[%c0_155, %c864] : memref<65x1024xf32, #tpu.memory_space<vmem>>, vector<65x32xf32>
    %cst_156 = arith.constant 0.176776692 : f32
    %163 = vector.broadcast %cst_156 : f32 to vector<65x32xf32>
    %164 = arith.mulf %162, %163 : vector<65x32xf32>
    %c6_157 = arith.constant 6 : index
    %c3_158 = arith.constant 3 : index
    %c0_159 = arith.constant 0 : index
    %c0_160 = arith.constant 0 : index
    %165 = vector.load %arg3[%c6_157, %c3_158, %c0_159, %c0_160] : memref<8x4x65x32xf32, #tpu.memory_space<vmem>>, vector<1x1x65x32xf32>
    %166 = vector.shape_cast %165 : vector<1x1x65x32xf32> to vector<65x32xf32>
    %167 = vector.shape_cast %164 : vector<65x32xf32> to vector<1x1x65x32xf32>
    tpu.vector_store %arg3[%c6_157, %c3_158, %c0_159, %c0_160], %167 {strides = array<i32>} : memref<8x4x65x32xf32, #tpu.memory_space<vmem>>, vector<1x1x65x32xf32>,
    %c0_161 = arith.constant 0 : index
    %c896 = arith.constant 896 : index
    %168 = vector.load %arg2[%c0_161, %c896] : memref<65x1024xf32, #tpu.memory_space<vmem>>, vector<65x32xf32>
    %cst_162 = arith.constant 0.176776692 : f32
    %169 = vector.broadcast %cst_162 : f32 to vector<65x32xf32>
    %170 = arith.mulf %168, %169 : vector<65x32xf32>
    %c7 = arith.constant 7 : index
    %c0_163 = arith.constant 0 : index
    %c0_164 = arith.constant 0 : index
    %c0_165 = arith.constant 0 : index
    %171 = vector.load %arg3[%c7, %c0_163, %c0_164, %c0_165] : memref<8x4x65x32xf32, #tpu.memory_space<vmem>>, vector<1x1x65x32xf32>
    %172 = vector.shape_cast %171 : vector<1x1x65x32xf32> to vector<65x32xf32>
    %173 = vector.shape_cast %170 : vector<65x32xf32> to vector<1x1x65x32xf32>
    tpu.vector_store %arg3[%c7, %c0_163, %c0_164, %c0_165], %173 {strides = array<i32>} : memref<8x4x65x32xf32, #tpu.memory_space<vmem>>, vector<1x1x65x32xf32>,
    %c0_166 = arith.constant 0 : index
    %c928 = arith.constant 928 : index
    %174 = vector.load %arg2[%c0_166, %c928] : memref<65x1024xf32, #tpu.memory_space<vmem>>, vector<65x32xf32>
    %cst_167 = arith.constant 0.176776692 : f32
    %175 = vector.broadcast %cst_167 : f32 to vector<65x32xf32>
    %176 = arith.mulf %174, %175 : vector<65x32xf32>
    %c7_168 = arith.constant 7 : index
    %c1_169 = arith.constant 1 : index
    %c0_170 = arith.constant 0 : index
    %c0_171 = arith.constant 0 : index
    %177 = vector.load %arg3[%c7_168, %c1_169, %c0_170, %c0_171] : memref<8x4x65x32xf32, #tpu.memory_space<vmem>>, vector<1x1x65x32xf32>
    %178 = vector.shape_cast %177 : vector<1x1x65x32xf32> to vector<65x32xf32>
    %179 = vector.shape_cast %176 : vector<65x32xf32> to vector<1x1x65x32xf32>
    tpu.vector_store %arg3[%c7_168, %c1_169, %c0_170, %c0_171], %179 {strides = array<i32>} : memref<8x4x65x32xf32, #tpu.memory_space<vmem>>, vector<1x1x65x32xf32>,
    %c0_172 = arith.constant 0 : index
    %c960 = arith.constant 960 : index
    %180 = vector.load %arg2[%c0_172, %c960] : memref<65x1024xf32, #tpu.memory_space<vmem>>, vector<65x32xf32>
    %cst_173 = arith.constant 0.176776692 : f32
    %181 = vector.broadcast %cst_173 : f32 to vector<65x32xf32>
    %182 = arith.mulf %180, %181 : vector<65x32xf32>
    %c7_174 = arith.constant 7 : index
    %c2_175 = arith.constant 2 : index
    %c0_176 = arith.constant 0 : index
    %c0_177 = arith.constant 0 : index
    %183 = vector.load %arg3[%c7_174, %c2_175, %c0_176, %c0_177] : memref<8x4x65x32xf32, #tpu.memory_space<vmem>>, vector<1x1x65x32xf32>
    %184 = vector.shape_cast %183 : vector<1x1x65x32xf32> to vector<65x32xf32>
    %185 = vector.shape_cast %182 : vector<65x32xf32> to vector<1x1x65x32xf32>
    tpu.vector_store %arg3[%c7_174, %c2_175, %c0_176, %c0_177], %185 {strides = array<i32>} : memref<8x4x65x32xf32, #tpu.memory_space<vmem>>, vector<1x1x65x32xf32>,
    %c0_178 = arith.constant 0 : index
    %c992 = arith.constant 992 : index
    %186 = vector.load %arg2[%c0_178, %c992] : memref<65x1024xf32, #tpu.memory_space<vmem>>, vector<65x32xf32>
    %cst_179 = arith.constant 0.176776692 : f32
    %187 = vector.broadcast %cst_179 : f32 to vector<65x32xf32>
    %188 = arith.mulf %186, %187 : vector<65x32xf32>
    %c7_180 = arith.constant 7 : index
    %c3_181 = arith.constant 3 : index
    %c0_182 = arith.constant 0 : index
    %c0_183 = arith.constant 0 : index
    %189 = vector.load %arg3[%c7_180, %c3_181, %c0_182, %c0_183] : memref<8x4x65x32xf32, #tpu.memory_space<vmem>>, vector<1x1x65x32xf32>
    %190 = vector.shape_cast %189 : vector<1x1x65x32xf32> to vector<65x32xf32>
    %191 = vector.shape_cast %188 : vector<65x32xf32> to vector<1x1x65x32xf32>
    tpu.vector_store %arg3[%c7_180, %c3_181, %c0_182, %c0_183], %191 {strides = array<i32>} : memref<8x4x65x32xf32, #tpu.memory_space<vmem>>, vector<1x1x65x32xf32>,
    return
  }
  func.func @transform_0(%arg0: i32, %arg1: i32) -> (i32, i32) {
    %c0_i32 = arith.constant 0 : i32
    return %arg1, %arg0 : i32, i32
  }
  func.func @transform_1(%arg0: i32, %arg1: i32) -> (i32, i32, i32, i32) {
    %c0_i32 = arith.constant 0 : i32
    %c0_i32_0 = arith.constant 0 : i32
    %c0_i32_1 = arith.constant 0 : i32
    return %arg0, %c0_i32, %arg1, %c0_i32_0 : i32, i32, i32, i32
  }
}

</mosaic_0001>

<llo_original>
// kernel: tpu_custom_call.1
$region0: #{tpu_custom_call.1}
  #allocation0 [shape = 'u32[]', space=smem, size = 0x4, offset = 0x4, fixed_abs, tag = 'smem constant byte address 0x4 - core index']
  #allocation1 [shape = 'u32[144,128]{1,0:T(1,128)}', space=vmem, size = 0x12000, scoped, tag = 'internal scratch']
  %s0 = inlined_call_operand.hbm [shape: f32[65,4096], index: 0, kind: input, shape index: {}]
  %s1 = inlined_call_operand.vmem [shape: f32[32,4,65,32], index: 1, kind: output, shape index: {}]
  %s2 = sld [smem:[#allocation0]]
  $region41: #{tpu_custom_call.1} parent=0
    _
  %s4 = ssub.s32 1, %s2
  %s5 = scalar_select 0, %s4, %s2
  $region1: #{tpu_custom_call.1} parent=0
    #allocation2 [shape = 'u8[589824]{0}', space=vmem, size = 0x90000, scoped, tag = 'input window, operand 0']
    #allocation3 [shape = 's32[2]{0}', space=sflag, size = 0x8, scoped, tag = 'scoped memory for tpu_custom_call.1']
    %6 = vsyncpa [#allocation3], 0
    %s7 = scalar_lea.sflag [#allocation3], 1
    %8 = vsyncpa %s7, 0
    loop: start=0, step=1, limit=6
    $region2: #{tpu_custom_call.1} parent=1 // loop_pre_header
      _
    $region3: #{tpu_custom_call.1} parent=1 // loop_header
      %s10 = sphi 0, %s14
      %p11 = scmp.ge.s32.totalorder %s10, 6
      %s17 = sphi 0, %s29
      %s18 = sphi 0, %s25
      %s19 = sphi 0, %s17
      %s20 = sphi 0, %s18
      %s21 = sphi 0, %s19
      %s22 = sphi 0, %s20
      %s34 = sphi 0, %s36
      %s37 = sphi 0, %s34
      %s38 = sphi 0, %s37
      %s54 = sphi 0, %s38
      %s62 = sphi 0, %s64
      %s65 = sphi 0, %s62
      %s66 = sphi 0, %s65
      %s82 = sphi 0, %s66
    $region4: #{tpu_custom_call.1} parent=1 // loop_header_branch
      %13 = sbr.rel (%p11) target = $region8
    $region5: #{tpu_custom_call.1} parent=1 // loop_body
      %s15 = ssub.s32 %s10, 1
      %s16 = ssub.s32 %s10, 2
      %s23 = sadd.s32 1, %s18
      %p24 = scmp.ge.s32.totalorder %s23, 1
      %s25 = scalar_select %p24, 0, %s23
      %s26 = sadd.s32 1, %s17
      %s27 = scalar_select %p24, %s26, %s17
      %p28 = scmp.ge.s32.totalorder %s27, 4
      %s29 = scalar_select %p28, 0, %s27
      %s30 = ssub.s32 %s18, %s25
      %s31 = ssub.s32 %s17, %s29
      %s32 = sor.u32 %s30, %s31
      %p33 = scmp.eq.s32.totalorder %s32, 0
      %s35 = sadd.s32 %s34, 1
      %s36 = scalar_select %p33, %s34, %s35
      %p39 = pneg %p33
      %p40 = scmp.eq.s32.totalorder %s10, 3
      %p41 = por %p39, %p40
      %p42 = scmp.ne.s32.totalorder %s34, %s37
      %p43 = scmp.eq.s32.totalorder %s10, 0
      %p44 = por %p42, %p43
      %p45 = scmp.ne.s32.totalorder %s34, %s37
      %p46 = scmp.eq.s32.totalorder %s15, 3
      %p47 = por %p45, %p46
      %p48 = scmp.ne.s32.totalorder %s37, %s38
      %p49 = scmp.eq.s32.totalorder %s15, 0
      %p50 = por %p48, %p49
      %p51 = scmp.ne.s32.totalorder %s37, %s38
      %p52 = scmp.eq.s32.totalorder %s16, 3
      %p53 = por %p51, %p52
      %p55 = scmp.ne.s32.totalorder %s38, %s54
      %p56 = scmp.eq.s32.totalorder %s16, 0
      %p57 = por %p55, %p56
      %s58 = ssub.s32 %s17, %s29
      %s59 = ssub.s32 %s18, %s25
      %s60 = sor.u32 %s58, %s59
      %p61 = scmp.eq.s32.totalorder %s60, 0
      %s63 = sadd.s32 %s62, 1
      %s64 = scalar_select %p61, %s62, %s63
      %p67 = pneg %p61
      %p68 = scmp.eq.s32.totalorder %s10, 3
      %p69 = por %p67, %p68
      %p70 = scmp.ne.s32.totalorder %s62, %s65
      %p71 = scmp.eq.s32.totalorder %s10, 0
      %p72 = por %p70, %p71
      %p73 = scmp.ne.s32.totalorder %s62, %s65
      %p74 = scmp.eq.s32.totalorder %s15, 3
      %p75 = por %p73, %p74
      %p76 = scmp.ne.s32.totalorder %s65, %s66
      %p77 = scmp.eq.s32.totalorder %s15, 0
      %p78 = por %p76, %p77
      %p79 = scmp.ne.s32.totalorder %s65, %s66
      %p80 = scmp.eq.s32.totalorder %s16, 3
      %p81 = por %p79, %p80
      %p83 = scmp.ne.s32.totalorder %s66, %s82
      %p84 = scmp.eq.s32.totalorder %s16, 0
      %p85 = por %p83, %p84
      %p86 = scmp.le.s32.totalorder 1, %s10
      %p87 = scmp.lt.s32.totalorder %s10, 5
      %p88 = pnand %p86, %p87
      %p89 = pneg %p88
      // Predicated region
      $region9: #{tpu_custom_call.1} parent=5 // pred_check
        _
      $region10: #{tpu_custom_call.1} parent=5 // pred_check_branch
        %91 = sbr.rel (%p88) target = $region12
      $region11: #{tpu_custom_call.1} parent=5 // pred_region
        %s92 = ssub.s32 %s10, 1
      $region12: #{tpu_custom_call.1} parent=5 // pred_fallthru
        _
      %p93 = scmp.lt.s32.totalorder %s10, 4
      // Predicated region
      $region13: #{tpu_custom_call.1} parent=5 // pred_check
        %p94 = pneg %p93
      $region14: #{tpu_custom_call.1} parent=5 // pred_check_branch
        %96 = sbr.rel (%p94) target = $region16
      $region15: #{tpu_custom_call.1} parent=5 // pred_region
        // Predicated region
        $region17: #{tpu_custom_call.1} parent=15 // pred_check
          %p97 = pneg %p44
        $region18: #{tpu_custom_call.1} parent=15 // pred_check_branch
          %99 = sbr.rel (%p97) target = $region20
        $region19: #{tpu_custom_call.1} parent=15 // pred_region
          %s100 = sand.u32 %s34, 1
          %s101 = scalar_lea.sflag [#allocation3], %s100
          %s102 = sand.u32 %s34, 1
          %s103 = smul.addr %s102, 576
          %s104 = scalar_lea.vmem [#allocation2], %s103
          %s105 = smul.u32 9, %s18
          %s106 = smul.u32 8, %s17
          %s108 = ssub.s32 9216, 9216
          %109 = vsyncadd %s101, %s108
          %s110 = smul.addr %s105, 32
          %s111 = sadd.s32 %s106, %s110
          %s112 = smul.addr %s111, 128
          %s113 = scalar_lea.hbm %s0, %s112
          %s114 = sshll.u32 %s104, 4
          %s115 = int_to_ptr.vmem [resolvable:$true] %s114
          %120 = dma.hbm_to_vmem [thread:$0]  %s113, 9216, %s115, %s101, 4096, 1024, 64
        $region20: #{tpu_custom_call.1} parent=15 // pred_fallthru
          _
      $region16: #{tpu_custom_call.1} parent=5 // pred_fallthru
        _
      %p121 = scmp.le.s32.totalorder 1, %s10
      %p122 = scmp.lt.s32.totalorder %s10, 5
      %p123 = pnand %p121, %p122
      %p124 = pneg %p123
      // Predicated region
      $region21: #{tpu_custom_call.1} parent=5 // pred_check
        _
      $region22: #{tpu_custom_call.1} parent=5 // pred_check_branch
        %126 = sbr.rel (%p123) target = $region24
      $region23: #{tpu_custom_call.1} parent=5 // pred_region
        %s127 = ssub.s32 %s10, 1
        %s128 = sand.u32 %s37, 1
        %s129 = scalar_lea.sflag [#allocation3], %s128
        %s130 = sand.u32 %s37, 1
        %s131 = smul.addr %s130, 576
        %s132 = scalar_lea.vmem [#allocation2], %s131
        // Predicated region
        $region25: #{tpu_custom_call.1} parent=23 // pred_check
          %p133 = pneg %p50
        $region26: #{tpu_custom_call.1} parent=23 // pred_check_branch
          %135 = sbr.rel (%p133) target = $region28
        $region27: #{tpu_custom_call.1} parent=23 // pred_region
          %136 = dma.done %s129, 9216
        $region28: #{tpu_custom_call.1} parent=23 // pred_fallthru
          _
        %s137 = sand.u32 %s37, 1
        %s138 = scalar_lea.sflag [#allocation3], %s137
        %s139 = sand.u32 %s37, 1
        %s140 = smul.addr %s139, 576
        %s141 = scalar_lea.vmem [#allocation2], %s140
        %p142 = pneg %p50
        %p143 = pneg %p47
        %p144 = pneg %p78
        %p145 = pneg %p75
        %s146 = smul.u32 8, %s19
        %s147 = smul.u32 9, %s20
        %p148 = scmp.lt.s32.totalorder %s146, 31
        %s149 = scalar_select %p148, %s146, 31
        %p150 = scmp.lt.s32.totalorder %s147, 8
        %s151 = scalar_select %p150, %s147, 8
        %s152 = smul.addr %s149, 36
        %s153 = sadd.s32 %s151, %s152
        %s154 = smul.addr %s153, 8
        %s155 = scalar_lea.vmem %s1, %s154
        %s156 = smul.u32 9, %s20
        %s157 = smul.u32 8, %s19
        %s158 = smul.u32 8, %s19
        %s159 = smul.u32 9, %s20
        %p160 = scmp.lt.s32.totalorder %s158, 31
        %s161 = scalar_select %p160, %s158, 31
        %p162 = scmp.lt.s32.totalorder %s159, 8
        %s163 = scalar_select %p162, %s159, 8
        %s164 = smul.addr %s161, 36
        %s165 = sadd.s32 %s163, %s164
        %s166 = smul.addr %s165, 8
        %s167 = scalar_lea.vmem %s1, %s166
        %s168 = smul.u32 8, %s19
        %s169 = smul.u32 9, %s20
        %v170 = vld [vmem:[%s132] sm:$0xff]
        %v171 = vld [vmem:[%s132 + $0x40] sm:$0xff]
        %v172 = vld [vmem:[%s132 + $0x80] sm:$0xff]
        %v173 = vld [vmem:[%s132 + $0xc0] sm:$0xff]
        %v174 = vld [vmem:[%s132 + $0x100] sm:$0xff]
        %v175 = vld [vmem:[%s132 + $0x140] sm:$0xff]
        %v176 = vld [vmem:[%s132 + $0x180] sm:$0xff]
        %v177 = vld [vmem:[%s132 + $0x1c0] sm:$0xff]
        %v178 = vld [vmem:[%s132 + $0x200] sm:$0x1]
        %v179 = vmul.f32 %v170, 0.17677669
        %v180 = vmul.f32 %v171, 0.17677669
        %v181 = vmul.f32 %v172, 0.17677669
        %v182 = vmul.f32 %v173, 0.17677669
        %v183 = vmul.f32 %v174, 0.17677669
        %v184 = vmul.f32 %v175, 0.17677669
        %v185 = vmul.f32 %v176, 0.17677669
        %v186 = vmul.f32 %v177, 0.17677669
        %v187 = vmul.f32 %v178, 0.17677669
        %vm188 = vcmask 261120
        %189 = vst.msk [vmem:[%s167] sm:$0xff] %vm188, %v179
        %190 = vst.msk [vmem:[%s167 + $0x8] sm:$0xff] %vm188, %v180
        %191 = vst.msk [vmem:[%s167 + $0x10] sm:$0xff] %vm188, %v181
        %192 = vst.msk [vmem:[%s167 + $0x18] sm:$0xff] %vm188, %v182
        %193 = vst.msk [vmem:[%s167 + $0x20] sm:$0xff] %vm188, %v183
        %194 = vst.msk [vmem:[%s167 + $0x28] sm:$0xff] %vm188, %v184
        %195 = vst.msk [vmem:[%s167 + $0x30] sm:$0xff] %vm188, %v185
        %196 = vst.msk [vmem:[%s167 + $0x38] sm:$0xff] %vm188, %v186
        %vm197 = vcmask 253952
        %198 = vst.msk [vmem:[%s167 + $0x40] sm:$0x1] %vm197, %v187
        %v199 = vld [vmem:[%s132] sm:$0xff]
        %v200 = vld [vmem:[%s132 + $0x40] sm:$0xff]
        %v201 = vld [vmem:[%s132 + $0x80] sm:$0xff]
        %v202 = vld [vmem:[%s132 + $0xc0] sm:$0xff]
        %v203 = vld [vmem:[%s132 + $0x100] sm:$0xff]
        %v204 = vld [vmem:[%s132 + $0x140] sm:$0xff]
        %v205 = vld [vmem:[%s132 + $0x180] sm:$0xff]
        %v206 = vld [vmem:[%s132 + $0x1c0] sm:$0xff]
        %v207 = vld [vmem:[%s132 + $0x200] sm:$0x1]
        %v208 = vmul.f32 %v199, 0.17677669
        %v209 = vmul.f32 %v200, 0.17677669
        %v210 = vmul.f32 %v201, 0.17677669
        %v211 = vmul.f32 %v202, 0.17677669
        %v212 = vmul.f32 %v203, 0.17677669
        %v213 = vmul.f32 %v204, 0.17677669
        %v214 = vmul.f32 %v205, 0.17677669
        %v215 = vmul.f32 %v206, 0.17677669
        %v216 = vmul.f32 %v207, 0.17677669
        %226 = vrot.lane.b32.xlu0 %v208, 96
        %v227 = vpop.permute.xlu0 %226
        %228 = vrot.lane.b32.xlu0 %v209, 96
        %v229 = vpop.permute.xlu0 %228
        %230 = vrot.lane.b32.xlu0 %v210, 96
        %v231 = vpop.permute.xlu0 %230
        %232 = vrot.lane.b32.xlu0 %v211, 96
        %v233 = vpop.permute.xlu0 %232
        %234 = vrot.lane.b32.xlu0 %v212, 96
        %v235 = vpop.permute.xlu0 %234
        %236 = vrot.lane.b32.xlu0 %v213, 96
        %v237 = vpop.permute.xlu0 %236
        %238 = vrot.lane.b32.xlu0 %v214, 96
        %v239 = vpop.permute.xlu0 %238
        %240 = vrot.lane.b32.xlu0 %v215, 96
        %v241 = vpop.permute.xlu0 %240
        %242 = vrot.lane.b32.xlu0 %v216, 96
        %v243 = vpop.permute.xlu0 %242
        %s253 = scalar_lea.vmem %s167, 72
        %254 = vst.msk [vmem:[%s253] sm:$0xff] %vm188, %v227
        %255 = vst.msk [vmem:[%s253 + $0x8] sm:$0xff] %vm188, %v229
        %256 = vst.msk [vmem:[%s253 + $0x10] sm:$0xff] %vm188, %v231
        %257 = vst.msk [vmem:[%s253 + $0x18] sm:$0xff] %vm188, %v233
        %258 = vst.msk [vmem:[%s253 + $0x20] sm:$0xff] %vm188, %v235
        %259 = vst.msk [vmem:[%s253 + $0x28] sm:$0xff] %vm188, %v237
        %260 = vst.msk [vmem:[%s253 + $0x30] sm:$0xff] %vm188, %v239
        %261 = vst.msk [vmem:[%s253 + $0x38] sm:$0xff] %vm188, %v241
        %262 = vst.msk [vmem:[%s253 + $0x40] sm:$0x1] %vm197, %v243
        %v263 = vld [vmem:[%s132] sm:$0xff]
        %v264 = vld [vmem:[%s132 + $0x40] sm:$0xff]
        %v265 = vld [vmem:[%s132 + $0x80] sm:$0xff]
        %v266 = vld [vmem:[%s132 + $0xc0] sm:$0xff]
        %v267 = vld [vmem:[%s132 + $0x100] sm:$0xff]
        %v268 = vld [vmem:[%s132 + $0x140] sm:$0xff]
        %v269 = vld [vmem:[%s132 + $0x180] sm:$0xff]
        %v270 = vld [vmem:[%s132 + $0x1c0] sm:$0xff]
        %v271 = vld [vmem:[%s132 + $0x200] sm:$0x1]
        %v272 = vmul.f32 %v263, 0.17677669
        %v273 = vmul.f32 %v264, 0.17677669
        %v274 = vmul.f32 %v265, 0.17677669
        %v275 = vmul.f32 %v266, 0.17677669
        %v276 = vmul.f32 %v267, 0.17677669
        %v277 = vmul.f32 %v268, 0.17677669
        %v278 = vmul.f32 %v269, 0.17677669
        %v279 = vmul.f32 %v270, 0.17677669
        %v280 = vmul.f32 %v271, 0.17677669
        %290 = vrot.lane.b32.xlu0 %v272, 64
        %v291 = vpop.permute.xlu0 %290
        %292 = vrot.lane.b32.xlu0 %v273, 64
        %v293 = vpop.permute.xlu0 %292
        %294 = vrot.lane.b32.xlu0 %v274, 64
        %v295 = vpop.permute.xlu0 %294
        %296 = vrot.lane.b32.xlu0 %v275, 64
        %v297 = vpop.permute.xlu0 %296
        %298 = vrot.lane.b32.xlu0 %v276, 64
        %v299 = vpop.permute.xlu0 %298
        %300 = vrot.lane.b32.xlu0 %v277, 64
        %v301 = vpop.permute.xlu0 %300
        %302 = vrot.lane.b32.xlu0 %v278, 64
        %v303 = vpop.permute.xlu0 %302
        %304 = vrot.lane.b32.xlu0 %v279, 64
        %v305 = vpop.permute.xlu0 %304
        %306 = vrot.lane.b32.xlu0 %v280, 64
        %v307 = vpop.permute.xlu0 %306
        %s317 = scalar_lea.vmem %s167, 144
        %318 = vst.msk [vmem:[%s317] sm:$0xff] %vm188, %v291
        %319 = vst.msk [vmem:[%s317 + $0x8] sm:$0xff] %vm188, %v293
        %320 = vst.msk [vmem:[%s317 + $0x10] sm:$0xff] %vm188, %v295
        %321 = vst.msk [vmem:[%s317 + $0x18] sm:$0xff] %vm188, %v297
        %322 = vst.msk [vmem:[%s317 + $0x20] sm:$0xff] %vm188, %v299
        %323 = vst.msk [vmem:[%s317 + $0x28] sm:$0xff] %vm188, %v301
        %324 = vst.msk [vmem:[%s317 + $0x30] sm:$0xff] %vm188, %v303
        %325 = vst.msk [vmem:[%s317 + $0x38] sm:$0xff] %vm188, %v305
        %326 = vst.msk [vmem:[%s317 + $0x40] sm:$0x1] %vm197, %v307
        %v327 = vld [vmem:[%s132] sm:$0xff]
        %v328 = vld [vmem:[%s132 + $0x40] sm:$0xff]
        %v329 = vld [vmem:[%s132 + $0x80] sm:$0xff]
        %v330 = vld [vmem:[%s132 + $0xc0] sm:$0xff]
        %v331 = vld [vmem:[%s132 + $0x100] sm:$0xff]
        %v332 = vld [vmem:[%s132 + $0x140] sm:$0xff]
        %v333 = vld [vmem:[%s132 + $0x180] sm:$0xff]
        %v334 = vld [vmem:[%s132 + $0x1c0] sm:$0xff]
        %v335 = vld [vmem:[%s132 + $0x200] sm:$0x1]
        %v336 = vmul.f32 %v327, 0.17677669
        %v337 = vmul.f32 %v328, 0.17677669
        %v338 = vmul.f32 %v329, 0.17677669
        %v339 = vmul.f32 %v330, 0.17677669
        %v340 = vmul.f32 %v331, 0.17677669
        %v341 = vmul.f32 %v332, 0.17677669
        %v342 = vmul.f32 %v333, 0.17677669
        %v343 = vmul.f32 %v334, 0.17677669
        %v344 = vmul.f32 %v335, 0.17677669
        %354 = vrot.lane.b32.xlu0 %v336, 32
        %v355 = vpop.permute.xlu0 %354
        %356 = vrot.lane.b32.xlu0 %v337, 32
        %v357 = vpop.permute.xlu0 %356
        %358 = vrot.lane.b32.xlu0 %v338, 32
        %v359 = vpop.permute.xlu0 %358
        %360 = vrot.lane.b32.xlu0 %v339, 32
        %v361 = vpop.permute.xlu0 %360
        %362 = vrot.lane.b32.xlu0 %v340, 32
        %v363 = vpop.permute.xlu0 %362
        %364 = vrot.lane.b32.xlu0 %v341, 32
        %v365 = vpop.permute.xlu0 %364
        %366 = vrot.lane.b32.xlu0 %v342, 32
        %v367 = vpop.permute.xlu0 %366
        %368 = vrot.lane.b32.xlu0 %v343, 32
        %v369 = vpop.permute.xlu0 %368
        %370 = vrot.lane.b32.xlu0 %v344, 32
        %v371 = vpop.permute.xlu0 %370
        %s381 = scalar_lea.vmem %s167, 216
        %382 = vst.msk [vmem:[%s381] sm:$0xff] %vm188, %v355
        %383 = vst.msk [vmem:[%s381 + $0x8] sm:$0xff] %vm188, %v357
        %384 = vst.msk [vmem:[%s381 + $0x10] sm:$0xff] %vm188, %v359
        %385 = vst.msk [vmem:[%s381 + $0x18] sm:$0xff] %vm188, %v361
        %386 = vst.msk [vmem:[%s381 + $0x20] sm:$0xff] %vm188, %v363
        %387 = vst.msk [vmem:[%s381 + $0x28] sm:$0xff] %vm188, %v365
        %388 = vst.msk [vmem:[%s381 + $0x30] sm:$0xff] %vm188, %v367
        %389 = vst.msk [vmem:[%s381 + $0x38] sm:$0xff] %vm188, %v369
        %390 = vst.msk [vmem:[%s381 + $0x40] sm:$0x1] %vm197, %v371
        %v391 = vld [vmem:[%s132 + $0x8] sm:$0xff]
        %v392 = vld [vmem:[%s132 + $0x48] sm:$0xff]
        %v393 = vld [vmem:[%s132 + $0x88] sm:$0xff]
        %v394 = vld [vmem:[%s132 + $0xc8] sm:$0xff]
        %v395 = vld [vmem:[%s132 + $0x108] sm:$0xff]
        %v396 = vld [vmem:[%s132 + $0x148] sm:$0xff]
        %v397 = vld [vmem:[%s132 + $0x188] sm:$0xff]
        %v398 = vld [vmem:[%s132 + $0x1c8] sm:$0xff]
        %v399 = vld [vmem:[%s132 + $0x208] sm:$0x1]
        %v400 = vmul.f32 %v391, 0.17677669
        %v401 = vmul.f32 %v392, 0.17677669
        %v402 = vmul.f32 %v393, 0.17677669
        %v403 = vmul.f32 %v394, 0.17677669
        %v404 = vmul.f32 %v395, 0.17677669
        %v405 = vmul.f32 %v396, 0.17677669
        %v406 = vmul.f32 %v397, 0.17677669
        %v407 = vmul.f32 %v398, 0.17677669
        %v408 = vmul.f32 %v399, 0.17677669
        %s409 = scalar_lea.vmem %s167, 288
        %410 = vst.msk [vmem:[%s409] sm:$0xff] %vm188, %v400
        %411 = vst.msk [vmem:[%s409 + $0x8] sm:$0xff] %vm188, %v401
        %412 = vst.msk [vmem:[%s409 + $0x10] sm:$0xff] %vm188, %v402
        %413 = vst.msk [vmem:[%s409 + $0x18] sm:$0xff] %vm188, %v403
        %414 = vst.msk [vmem:[%s409 + $0x20] sm:$0xff] %vm188, %v404
        %415 = vst.msk [vmem:[%s409 + $0x28] sm:$0xff] %vm188, %v405
        %416 = vst.msk [vmem:[%s409 + $0x30] sm:$0xff] %vm188, %v406
        %417 = vst.msk [vmem:[%s409 + $0x38] sm:$0xff] %vm188, %v407
        %418 = vst.msk [vmem:[%s409 + $0x40] sm:$0x1] %vm197, %v408
        %v419 = vld [vmem:[%s132 + $0x8] sm:$0xff]
        %v420 = vld [vmem:[%s132 + $0x48] sm:$0xff]
        %v421 = vld [vmem:[%s132 + $0x88] sm:$0xff]
        %v422 = vld [vmem:[%s132 + $0xc8] sm:$0xff]
        %v423 = vld [vmem:[%s132 + $0x108] sm:$0xff]
        %v424 = vld [vmem:[%s132 + $0x148] sm:$0xff]
        %v425 = vld [vmem:[%s132 + $0x188] sm:$0xff]
        %v426 = vld [vmem:[%s132 + $0x1c8] sm:$0xff]
        %v427 = vld [vmem:[%s132 + $0x208] sm:$0x1]
        %v428 = vmul.f32 %v419, 0.17677669
        %v429 = vmul.f32 %v420, 0.17677669
        %v430 = vmul.f32 %v421, 0.17677669
        %v431 = vmul.f32 %v422, 0.17677669
        %v432 = vmul.f32 %v423, 0.17677669
        %v433 = vmul.f32 %v424, 0.17677669
        %v434 = vmul.f32 %v425, 0.17677669
        %v435 = vmul.f32 %v426, 0.17677669
        %v436 = vmul.f32 %v427, 0.17677669
        %446 = vrot.lane.b32.xlu0 %v428, 96
        %v447 = vpop.permute.xlu0 %446
        %448 = vrot.lane.b32.xlu0 %v429, 96
        %v449 = vpop.permute.xlu0 %448
        %450 = vrot.lane.b32.xlu0 %v430, 96
        %v451 = vpop.permute.xlu0 %450
        %452 = vrot.lane.b32.xlu0 %v431, 96
        %v453 = vpop.permute.xlu0 %452
        %454 = vrot.lane.b32.xlu0 %v432, 96
        %v455 = vpop.permute.xlu0 %454
        %456 = vrot.lane.b32.xlu0 %v433, 96
        %v457 = vpop.permute.xlu0 %456
        %458 = vrot.lane.b32.xlu0 %v434, 96
        %v459 = vpop.permute.xlu0 %458
        %460 = vrot.lane.b32.xlu0 %v435, 96
        %v461 = vpop.permute.xlu0 %460
        %462 = vrot.lane.b32.xlu0 %v436, 96
        %v463 = vpop.permute.xlu0 %462
        %s473 = scalar_lea.vmem %s167, 360
        %474 = vst.msk [vmem:[%s473] sm:$0xff] %vm188, %v447
        %475 = vst.msk [vmem:[%s473 + $0x8] sm:$0xff] %vm188, %v449
        %476 = vst.msk [vmem:[%s473 + $0x10] sm:$0xff] %vm188, %v451
        %477 = vst.msk [vmem:[%s473 + $0x18] sm:$0xff] %vm188, %v453
        %478 = vst.msk [vmem:[%s473 + $0x20] sm:$0xff] %vm188, %v455
        %479 = vst.msk [vmem:[%s473 + $0x28] sm:$0xff] %vm188, %v457
        %480 = vst.msk [vmem:[%s473 + $0x30] sm:$0xff] %vm188, %v459
        %481 = vst.msk [vmem:[%s473 + $0x38] sm:$0xff] %vm188, %v461
        %482 = vst.msk [vmem:[%s473 + $0x40] sm:$0x1] %vm197, %v463
        %v483 = vld [vmem:[%s132 + $0x8] sm:$0xff]
        %v484 = vld [vmem:[%s132 + $0x48] sm:$0xff]
        %v485 = vld [vmem:[%s132 + $0x88] sm:$0xff]
        %v486 = vld [vmem:[%s132 + $0xc8] sm:$0xff]
        %v487 = vld [vmem:[%s132 + $0x108] sm:$0xff]
        %v488 = vld [vmem:[%s132 + $0x148] sm:$0xff]
        %v489 = vld [vmem:[%s132 + $0x188] sm:$0xff]
        %v490 = vld [vmem:[%s132 + $0x1c8] sm:$0xff]
        %v491 = vld [vmem:[%s132 + $0x208] sm:$0x1]
        %v492 = vmul.f32 %v483, 0.17677669
        %v493 = vmul.f32 %v484, 0.17677669
        %v494 = vmul.f32 %v485, 0.17677669
        %v495 = vmul.f32 %v486, 0.17677669
        %v496 = vmul.f32 %v487, 0.17677669
        %v497 = vmul.f32 %v488, 0.17677669
        %v498 = vmul.f32 %v489, 0.17677669
        %v499 = vmul.f32 %v490, 0.17677669
        %v500 = vmul.f32 %v491, 0.17677669
        %510 = vrot.lane.b32.xlu0 %v492, 64
        %v511 = vpop.permute.xlu0 %510
        %512 = vrot.lane.b32.xlu0 %v493, 64
        %v513 = vpop.permute.xlu0 %512
        %514 = vrot.lane.b32.xlu0 %v494, 64
        %v515 = vpop.permute.xlu0 %514
        %516 = vrot.lane.b32.xlu0 %v495, 64
        %v517 = vpop.permute.xlu0 %516
        %518 = vrot.lane.b32.xlu0 %v496, 64
        %v519 = vpop.permute.xlu0 %518
        %520 = vrot.lane.b32.xlu0 %v497, 64
        %v521 = vpop.permute.xlu0 %520
        %522 = vrot.lane.b32.xlu0 %v498, 64
        %v523 = vpop.permute.xlu0 %522
        %524 = vrot.lane.b32.xlu0 %v499, 64
        %v525 = vpop.permute.xlu0 %524
        %526 = vrot.lane.b32.xlu0 %v500, 64
        %v527 = vpop.permute.xlu0 %526
        %s537 = scalar_lea.vmem %s167, 432
        %538 = vst.msk [vmem:[%s537] sm:$0xff] %vm188, %v511
        %539 = vst.msk [vmem:[%s537 + $0x8] sm:$0xff] %vm188, %v513
        %540 = vst.msk [vmem:[%s537 + $0x10] sm:$0xff] %vm188, %v515
        %541 = vst.msk [vmem:[%s537 + $0x18] sm:$0xff] %vm188, %v517
        %542 = vst.msk [vmem:[%s537 + $0x20] sm:$0xff] %vm188, %v519
        %543 = vst.msk [vmem:[%s537 + $0x28] sm:$0xff] %vm188, %v521
        %544 = vst.msk [vmem:[%s537 + $0x30] sm:$0xff] %vm188, %v523
        %545 = vst.msk [vmem:[%s537 + $0x38] sm:$0xff] %vm188, %v525
        %546 = vst.msk [vmem:[%s537 + $0x40] sm:$0x1] %vm197, %v527
        %v547 = vld [vmem:[%s132 + $0x8] sm:$0xff]
        %v548 = vld [vmem:[%s132 + $0x48] sm:$0xff]
        %v549 = vld [vmem:[%s132 + $0x88] sm:$0xff]
        %v550 = vld [vmem:[%s132 + $0xc8] sm:$0xff]
        %v551 = vld [vmem:[%s132 + $0x108] sm:$0xff]
        %v552 = vld [vmem:[%s132 + $0x148] sm:$0xff]
        %v553 = vld [vmem:[%s132 + $0x188] sm:$0xff]
        %v554 = vld [vmem:[%s132 + $0x1c8] sm:$0xff]
        %v555 = vld [vmem:[%s132 + $0x208] sm:$0x1]
        %v556 = vmul.f32 %v547, 0.17677669
        %v557 = vmul.f32 %v548, 0.17677669
        %v558 = vmul.f32 %v549, 0.17677669
        %v559 = vmul.f32 %v550, 0.17677669
        %v560 = vmul.f32 %v551, 0.17677669
        %v561 = vmul.f32 %v552, 0.17677669
        %v562 = vmul.f32 %v553, 0.17677669
        %v563 = vmul.f32 %v554, 0.17677669
        %v564 = vmul.f32 %v555, 0.17677669
        %574 = vrot.lane.b32.xlu0 %v556, 32
        %v575 = vpop.permute.xlu0 %574
        %576 = vrot.lane.b32.xlu0 %v557, 32
        %v577 = vpop.permute.xlu0 %576
        %578 = vrot.lane.b32.xlu0 %v558, 32
        %v579 = vpop.permute.xlu0 %578
        %580 = vrot.lane.b32.xlu0 %v559, 32
        %v581 = vpop.permute.xlu0 %580
        %582 = vrot.lane.b32.xlu0 %v560, 32
        %v583 = vpop.permute.xlu0 %582
        %584 = vrot.lane.b32.xlu0 %v561, 32
        %v585 = vpop.permute.xlu0 %584
        %586 = vrot.lane.b32.xlu0 %v562, 32
        %v587 = vpop.permute.xlu0 %586
        %588 = vrot.lane.b32.xlu0 %v563, 32
        %v589 = vpop.permute.xlu0 %588
        %590 = vrot.lane.b32.xlu0 %v564, 32
        %v591 = vpop.permute.xlu0 %590
        %s601 = scalar_lea.vmem %s167, 504
        %602 = vst.msk [vmem:[%s601] sm:$0xff] %vm188, %v575
        %603 = vst.msk [vmem:[%s601 + $0x8] sm:$0xff] %vm188, %v577
        %604 = vst.msk [vmem:[%s601 + $0x10] sm:$0xff] %vm188, %v579
        %605 = vst.msk [vmem:[%s601 + $0x18] sm:$0xff] %vm188, %v581
        %606 = vst.msk [vmem:[%s601 + $0x20] sm:$0xff] %vm188, %v583
        %607 = vst.msk [vmem:[%s601 + $0x28] sm:$0xff] %vm188, %v585
        %608 = vst.msk [vmem:[%s601 + $0x30] sm:$0xff] %vm188, %v587
        %609 = vst.msk [vmem:[%s601 + $0x38] sm:$0xff] %vm188, %v589
        %610 = vst.msk [vmem:[%s601 + $0x40] sm:$0x1] %vm197, %v591
        %v611 = vld [vmem:[%s132 + $0x10] sm:$0xff]
        %v612 = vld [vmem:[%s132 + $0x50] sm:$0xff]
        %v613 = vld [vmem:[%s132 + $0x90] sm:$0xff]
        %v614 = vld [vmem:[%s132 + $0xd0] sm:$0xff]
        %v615 = vld [vmem:[%s132 + $0x110] sm:$0xff]
        %v616 = vld [vmem:[%s132 + $0x150] sm:$0xff]
        %v617 = vld [vmem:[%s132 + $0x190] sm:$0xff]
        %v618 = vld [vmem:[%s132 + $0x1d0] sm:$0xff]
        %v619 = vld [vmem:[%s132 + $0x210] sm:$0x1]
        %v620 = vmul.f32 %v611, 0.17677669
        %v621 = vmul.f32 %v612, 0.17677669
        %v622 = vmul.f32 %v613, 0.17677669
        %v623 = vmul.f32 %v614, 0.17677669
        %v624 = vmul.f32 %v615, 0.17677669
        %v625 = vmul.f32 %v616, 0.17677669
        %v626 = vmul.f32 %v617, 0.17677669
        %v627 = vmul.f32 %v618, 0.17677669
        %v628 = vmul.f32 %v619, 0.17677669
        %s629 = scalar_lea.vmem %s167, 576
        %630 = vst.msk [vmem:[%s629] sm:$0xff] %vm188, %v620
        %631 = vst.msk [vmem:[%s629 + $0x8] sm:$0xff] %vm188, %v621
        %632 = vst.msk [vmem:[%s629 + $0x10] sm:$0xff] %vm188, %v622
        %633 = vst.msk [vmem:[%s629 + $0x18] sm:$0xff] %vm188, %v623
        %634 = vst.msk [vmem:[%s629 + $0x20] sm:$0xff] %vm188, %v624
        %635 = vst.msk [vmem:[%s629 + $0x28] sm:$0xff] %vm188, %v625
        %636 = vst.msk [vmem:[%s629 + $0x30] sm:$0xff] %vm188, %v626
        %637 = vst.msk [vmem:[%s629 + $0x38] sm:$0xff] %vm188, %v627
        %638 = vst.msk [vmem:[%s629 + $0x40] sm:$0x1] %vm197, %v628
        %v639 = vld [vmem:[%s132 + $0x10] sm:$0xff]
        %v640 = vld [vmem:[%s132 + $0x50] sm:$0xff]
        %v641 = vld [vmem:[%s132 + $0x90] sm:$0xff]
        %v642 = vld [vmem:[%s132 + $0xd0] sm:$0xff]
        %v643 = vld [vmem:[%s132 + $0x110] sm:$0xff]
        %v644 = vld [vmem:[%s132 + $0x150] sm:$0xff]
        %v645 = vld [vmem:[%s132 + $0x190] sm:$0xff]
        %v646 = vld [vmem:[%s132 + $0x1d0] sm:$0xff]
        %v647 = vld [vmem:[%s132 + $0x210] sm:$0x1]
        %v648 = vmul.f32 %v639, 0.17677669
        %v649 = vmul.f32 %v640, 0.17677669
        %v650 = vmul.f32 %v641, 0.17677669
        %v651 = vmul.f32 %v642, 0.17677669
        %v652 = vmul.f32 %v643, 0.17677669
        %v653 = vmul.f32 %v644, 0.17677669
        %v654 = vmul.f32 %v645, 0.17677669
        %v655 = vmul.f32 %v646, 0.17677669
        %v656 = vmul.f32 %v647, 0.17677669
        %666 = vrot.lane.b32.xlu0 %v648, 96
        %v667 = vpop.permute.xlu0 %666
        %668 = vrot.lane.b32.xlu0 %v649, 96
        %v669 = vpop.permute.xlu0 %668
        %670 = vrot.lane.b32.xlu0 %v650, 96
        %v671 = vpop.permute.xlu0 %670
        %672 = vrot.lane.b32.xlu0 %v651, 96
        %v673 = vpop.permute.xlu0 %672
        %674 = vrot.lane.b32.xlu0 %v652, 96
        %v675 = vpop.permute.xlu0 %674
        %676 = vrot.lane.b32.xlu0 %v653, 96
        %v677 = vpop.permute.xlu0 %676
        %678 = vrot.lane.b32.xlu0 %v654, 96
        %v679 = vpop.permute.xlu0 %678
        %680 = vrot.lane.b32.xlu0 %v655, 96
        %v681 = vpop.permute.xlu0 %680
        %682 = vrot.lane.b32.xlu0 %v656, 96
        %v683 = vpop.permute.xlu0 %682
        %s693 = scalar_lea.vmem %s167, 648
        %694 = vst.msk [vmem:[%s693] sm:$0xff] %vm188, %v667
        %695 = vst.msk [vmem:[%s693 + $0x8] sm:$0xff] %vm188, %v669
        %696 = vst.msk [vmem:[%s693 + $0x10] sm:$0xff] %vm188, %v671
        %697 = vst.msk [vmem:[%s693 + $0x18] sm:$0xff] %vm188, %v673
        %698 = vst.msk [vmem:[%s693 + $0x20] sm:$0xff] %vm188, %v675
        %699 = vst.msk [vmem:[%s693 + $0x28] sm:$0xff] %vm188, %v677
        %700 = vst.msk [vmem:[%s693 + $0x30] sm:$0xff] %vm188, %v679
        %701 = vst.msk [vmem:[%s693 + $0x38] sm:$0xff] %vm188, %v681
        %702 = vst.msk [vmem:[%s693 + $0x40] sm:$0x1] %vm197, %v683
        %v703 = vld [vmem:[%s132 + $0x10] sm:$0xff]
        %v704 = vld [vmem:[%s132 + $0x50] sm:$0xff]
        %v705 = vld [vmem:[%s132 + $0x90] sm:$0xff]
        %v706 = vld [vmem:[%s132 + $0xd0] sm:$0xff]
        %v707 = vld [vmem:[%s132 + $0x110] sm:$0xff]
        %v708 = vld [vmem:[%s132 + $0x150] sm:$0xff]
        %v709 = vld [vmem:[%s132 + $0x190] sm:$0xff]
        %v710 = vld [vmem:[%s132 + $0x1d0] sm:$0xff]
        %v711 = vld [vmem:[%s132 + $0x210] sm:$0x1]
        %v712 = vmul.f32 %v703, 0.17677669
        %v713 = vmul.f32 %v704, 0.17677669
        %v714 = vmul.f32 %v705, 0.17677669
        %v715 = vmul.f32 %v706, 0.17677669
        %v716 = vmul.f32 %v707, 0.17677669
        %v717 = vmul.f32 %v708, 0.17677669
        %v718 = vmul.f32 %v709, 0.17677669
        %v719 = vmul.f32 %v710, 0.17677669
        %v720 = vmul.f32 %v711, 0.17677669
        %730 = vrot.lane.b32.xlu0 %v712, 64
        %v731 = vpop.permute.xlu0 %730
        %732 = vrot.lane.b32.xlu0 %v713, 64
        %v733 = vpop.permute.xlu0 %732
        %734 = vrot.lane.b32.xlu0 %v714, 64
        %v735 = vpop.permute.xlu0 %734
        %736 = vrot.lane.b32.xlu0 %v715, 64
        %v737 = vpop.permute.xlu0 %736
        %738 = vrot.lane.b32.xlu0 %v716, 64
        %v739 = vpop.permute.xlu0 %738
        %740 = vrot.lane.b32.xlu0 %v717, 64
        %v741 = vpop.permute.xlu0 %740
        %742 = vrot.lane.b32.xlu0 %v718, 64
        %v743 = vpop.permute.xlu0 %742
        %744 = vrot.lane.b32.xlu0 %v719, 64
        %v745 = vpop.permute.xlu0 %744
        %746 = vrot.lane.b32.xlu0 %v720, 64
        %v747 = vpop.permute.xlu0 %746
        %s757 = scalar_lea.vmem %s167, 720
        %758 = vst.msk [vmem:[%s757] sm:$0xff] %vm188, %v731
        %759 = vst.msk [vmem:[%s757 + $0x8] sm:$0xff] %vm188, %v733
        %760 = vst.msk [vmem:[%s757 + $0x10] sm:$0xff] %vm188, %v735
        %761 = vst.msk [vmem:[%s757 + $0x18] sm:$0xff] %vm188, %v737
        %762 = vst.msk [vmem:[%s757 + $0x20] sm:$0xff] %vm188, %v739
        %763 = vst.msk [vmem:[%s757 + $0x28] sm:$0xff] %vm188, %v741
        %764 = vst.msk [vmem:[%s757 + $0x30] sm:$0xff] %vm188, %v743
        %765 = vst.msk [vmem:[%s757 + $0x38] sm:$0xff] %vm188, %v745
        %766 = vst.msk [vmem:[%s757 + $0x40] sm:$0x1] %vm197, %v747
        %v767 = vld [vmem:[%s132 + $0x10] sm:$0xff]
        %v768 = vld [vmem:[%s132 + $0x50] sm:$0xff]
        %v769 = vld [vmem:[%s132 + $0x90] sm:$0xff]
        %v770 = vld [vmem:[%s132 + $0xd0] sm:$0xff]
        %v771 = vld [vmem:[%s132 + $0x110] sm:$0xff]
        %v772 = vld [vmem:[%s132 + $0x150] sm:$0xff]
        %v773 = vld [vmem:[%s132 + $0x190] sm:$0xff]
        %v774 = vld [vmem:[%s132 + $0x1d0] sm:$0xff]
        %v775 = vld [vmem:[%s132 + $0x210] sm:$0x1]
        %v776 = vmul.f32 %v767, 0.17677669
        %v777 = vmul.f32 %v768, 0.17677669
        %v778 = vmul.f32 %v769, 0.17677669
        %v779 = vmul.f32 %v770, 0.17677669
        %v780 = vmul.f32 %v771, 0.17677669
        %v781 = vmul.f32 %v772, 0.17677669
        %v782 = vmul.f32 %v773, 0.17677669
        %v783 = vmul.f32 %v774, 0.17677669
        %v784 = vmul.f32 %v775, 0.17677669
        %794 = vrot.lane.b32.xlu0 %v776, 32
        %v795 = vpop.permute.xlu0 %794
        %796 = vrot.lane.b32.xlu0 %v777, 32
        %v797 = vpop.permute.xlu0 %796
        %798 = vrot.lane.b32.xlu0 %v778, 32
        %v799 = vpop.permute.xlu0 %798
        %800 = vrot.lane.b32.xlu0 %v779, 32
        %v801 = vpop.permute.xlu0 %800
        %802 = vrot.lane.b32.xlu0 %v780, 32
        %v803 = vpop.permute.xlu0 %802
        %804 = vrot.lane.b32.xlu0 %v781, 32
        %v805 = vpop.permute.xlu0 %804
        %806 = vrot.lane.b32.xlu0 %v782, 32
        %v807 = vpop.permute.xlu0 %806
        %808 = vrot.lane.b32.xlu0 %v783, 32
        %v809 = vpop.permute.xlu0 %808
        %810 = vrot.lane.b32.xlu0 %v784, 32
        %v811 = vpop.permute.xlu0 %810
        %s821 = scalar_lea.vmem %s167, 792
        %822 = vst.msk [vmem:[%s821] sm:$0xff] %vm188, %v795
        %823 = vst.msk [vmem:[%s821 + $0x8] sm:$0xff] %vm188, %v797
        %824 = vst.msk [vmem:[%s821 + $0x10] sm:$0xff] %vm188, %v799
        %825 = vst.msk [vmem:[%s821 + $0x18] sm:$0xff] %vm188, %v801
        %826 = vst.msk [vmem:[%s821 + $0x20] sm:$0xff] %vm188, %v803
        %827 = vst.msk [vmem:[%s821 + $0x28] sm:$0xff] %vm188, %v805
        %828 = vst.msk [vmem:[%s821 + $0x30] sm:$0xff] %vm188, %v807
        %829 = vst.msk [vmem:[%s821 + $0x38] sm:$0xff] %vm188, %v809
        %830 = vst.msk [vmem:[%s821 + $0x40] sm:$0x1] %vm197, %v811
        %v831 = vld [vmem:[%s132 + $0x18] sm:$0xff]
        %v832 = vld [vmem:[%s132 + $0x58] sm:$0xff]
        %v833 = vld [vmem:[%s132 + $0x98] sm:$0xff]
        %v834 = vld [vmem:[%s132 + $0xd8] sm:$0xff]
        %v835 = vld [vmem:[%s132 + $0x118] sm:$0xff]
        %v836 = vld [vmem:[%s132 + $0x158] sm:$0xff]
        %v837 = vld [vmem:[%s132 + $0x198] sm:$0xff]
        %v838 = vld [vmem:[%s132 + $0x1d8] sm:$0xff]
        %v839 = vld [vmem:[%s132 + $0x218] sm:$0x1]
        %v840 = vmul.f32 %v831, 0.17677669
        %v841 = vmul.f32 %v832, 0.17677669
        %v842 = vmul.f32 %v833, 0.17677669
        %v843 = vmul.f32 %v834, 0.17677669
        %v844 = vmul.f32 %v835, 0.17677669
        %v845 = vmul.f32 %v836, 0.17677669
        %v846 = vmul.f32 %v837, 0.17677669
        %v847 = vmul.f32 %v838, 0.17677669
        %v848 = vmul.f32 %v839, 0.17677669
        %s849 = scalar_lea.vmem %s167, 864
        %850 = vst.msk [vmem:[%s849] sm:$0xff] %vm188, %v840
        %851 = vst.msk [vmem:[%s849 + $0x8] sm:$0xff] %vm188, %v841
        %852 = vst.msk [vmem:[%s849 + $0x10] sm:$0xff] %vm188, %v842
        %853 = vst.msk [vmem:[%s849 + $0x18] sm:$0xff] %vm188, %v843
        %854 = vst.msk [vmem:[%s849 + $0x20] sm:$0xff] %vm188, %v844
        %855 = vst.msk [vmem:[%s849 + $0x28] sm:$0xff] %vm188, %v845
        %856 = vst.msk [vmem:[%s849 + $0x30] sm:$0xff] %vm188, %v846
        %857 = vst.msk [vmem:[%s849 + $0x38] sm:$0xff] %vm188, %v847
        %858 = vst.msk [vmem:[%s849 + $0x40] sm:$0x1] %vm197, %v848
        %v859 = vld [vmem:[%s132 + $0x18] sm:$0xff]
        %v860 = vld [vmem:[%s132 + $0x58] sm:$0xff]
        %v861 = vld [vmem:[%s132 + $0x98] sm:$0xff]
        %v862 = vld [vmem:[%s132 + $0xd8] sm:$0xff]
        %v863 = vld [vmem:[%s132 + $0x118] sm:$0xff]
        %v864 = vld [vmem:[%s132 + $0x158] sm:$0xff]
        %v865 = vld [vmem:[%s132 + $0x198] sm:$0xff]
        %v866 = vld [vmem:[%s132 + $0x1d8] sm:$0xff]
        %v867 = vld [vmem:[%s132 + $0x218] sm:$0x1]
        %v868 = vmul.f32 %v859, 0.17677669
        %v869 = vmul.f32 %v860, 0.17677669
        %v870 = vmul.f32 %v861, 0.17677669
        %v871 = vmul.f32 %v862, 0.17677669
        %v872 = vmul.f32 %v863, 0.17677669
        %v873 = vmul.f32 %v864, 0.17677669
        %v874 = vmul.f32 %v865, 0.17677669
        %v875 = vmul.f32 %v866, 0.17677669
        %v876 = vmul.f32 %v867, 0.17677669
        %886 = vrot.lane.b32.xlu0 %v868, 96
        %v887 = vpop.permute.xlu0 %886
        %888 = vrot.lane.b32.xlu0 %v869, 96
        %v889 = vpop.permute.xlu0 %888
        %890 = vrot.lane.b32.xlu0 %v870, 96
        %v891 = vpop.permute.xlu0 %890
        %892 = vrot.lane.b32.xlu0 %v871, 96
        %v893 = vpop.permute.xlu0 %892
        %894 = vrot.lane.b32.xlu0 %v872, 96
        %v895 = vpop.permute.xlu0 %894
        %896 = vrot.lane.b32.xlu0 %v873, 96
        %v897 = vpop.permute.xlu0 %896
        %898 = vrot.lane.b32.xlu0 %v874, 96
        %v899 = vpop.permute.xlu0 %898
        %900 = vrot.lane.b32.xlu0 %v875, 96
        %v901 = vpop.permute.xlu0 %900
        %902 = vrot.lane.b32.xlu0 %v876, 96
        %v903 = vpop.permute.xlu0 %902
        %s913 = scalar_lea.vmem %s167, 936
        %914 = vst.msk [vmem:[%s913] sm:$0xff] %vm188, %v887
        %915 = vst.msk [vmem:[%s913 + $0x8] sm:$0xff] %vm188, %v889
        %916 = vst.msk [vmem:[%s913 + $0x10] sm:$0xff] %vm188, %v891
        %917 = vst.msk [vmem:[%s913 + $0x18] sm:$0xff] %vm188, %v893
        %918 = vst.msk [vmem:[%s913 + $0x20] sm:$0xff] %vm188, %v895
        %919 = vst.msk [vmem:[%s913 + $0x28] sm:$0xff] %vm188, %v897
        %920 = vst.msk [vmem:[%s913 + $0x30] sm:$0xff] %vm188, %v899
        %921 = vst.msk [vmem:[%s913 + $0x38] sm:$0xff] %vm188, %v901
        %922 = vst.msk [vmem:[%s913 + $0x40] sm:$0x1] %vm197, %v903
        %v923 = vld [vmem:[%s132 + $0x18] sm:$0xff]
        %v924 = vld [vmem:[%s132 + $0x58] sm:$0xff]
        %v925 = vld [vmem:[%s132 + $0x98] sm:$0xff]
        %v926 = vld [vmem:[%s132 + $0xd8] sm:$0xff]
        %v927 = vld [vmem:[%s132 + $0x118] sm:$0xff]
        %v928 = vld [vmem:[%s132 + $0x158] sm:$0xff]
        %v929 = vld [vmem:[%s132 + $0x198] sm:$0xff]
        %v930 = vld [vmem:[%s132 + $0x1d8] sm:$0xff]
        %v931 = vld [vmem:[%s132 + $0x218] sm:$0x1]
        %v932 = vmul.f32 %v923, 0.17677669
        %v933 = vmul.f32 %v924, 0.17677669
        %v934 = vmul.f32 %v925, 0.17677669
        %v935 = vmul.f32 %v926, 0.17677669
        %v936 = vmul.f32 %v927, 0.17677669
        %v937 = vmul.f32 %v928, 0.17677669
        %v938 = vmul.f32 %v929, 0.17677669
        %v939 = vmul.f32 %v930, 0.17677669
        %v940 = vmul.f32 %v931, 0.17677669
        %950 = vrot.lane.b32.xlu0 %v932, 64
        %v951 = vpop.permute.xlu0 %950
        %952 = vrot.lane.b32.xlu0 %v933, 64
        %v953 = vpop.permute.xlu0 %952
        %954 = vrot.lane.b32.xlu0 %v934, 64
        %v955 = vpop.permute.xlu0 %954
        %956 = vrot.lane.b32.xlu0 %v935, 64
        %v957 = vpop.permute.xlu0 %956
        %958 = vrot.lane.b32.xlu0 %v936, 64
        %v959 = vpop.permute.xlu0 %958
        %960 = vrot.lane.b32.xlu0 %v937, 64
        %v961 = vpop.permute.xlu0 %960
        %962 = vrot.lane.b32.xlu0 %v938, 64
        %v963 = vpop.permute.xlu0 %962
        %964 = vrot.lane.b32.xlu0 %v939, 64
        %v965 = vpop.permute.xlu0 %964
        %966 = vrot.lane.b32.xlu0 %v940, 64
        %v967 = vpop.permute.xlu0 %966
        %s977 = scalar_lea.vmem %s167, 1008
        %978 = vst.msk [vmem:[%s977] sm:$0xff] %vm188, %v951
        %979 = vst.msk [vmem:[%s977 + $0x8] sm:$0xff] %vm188, %v953
        %980 = vst.msk [vmem:[%s977 + $0x10] sm:$0xff] %vm188, %v955
        %981 = vst.msk [vmem:[%s977 + $0x18] sm:$0xff] %vm188, %v957
        %982 = vst.msk [vmem:[%s977 + $0x20] sm:$0xff] %vm188, %v959
        %983 = vst.msk [vmem:[%s977 + $0x28] sm:$0xff] %vm188, %v961
        %984 = vst.msk [vmem:[%s977 + $0x30] sm:$0xff] %vm188, %v963
        %985 = vst.msk [vmem:[%s977 + $0x38] sm:$0xff] %vm188, %v965
        %986 = vst.msk [vmem:[%s977 + $0x40] sm:$0x1] %vm197, %v967
        %v987 = vld [vmem:[%s132 + $0x18] sm:$0xff]
        %v988 = vld [vmem:[%s132 + $0x58] sm:$0xff]
        %v989 = vld [vmem:[%s132 + $0x98] sm:$0xff]
        %v990 = vld [vmem:[%s132 + $0xd8] sm:$0xff]
        %v991 = vld [vmem:[%s132 + $0x118] sm:$0xff]
        %v992 = vld [vmem:[%s132 + $0x158] sm:$0xff]
        %v993 = vld [vmem:[%s132 + $0x198] sm:$0xff]
        %v994 = vld [vmem:[%s132 + $0x1d8] sm:$0xff]
        %v995 = vld [vmem:[%s132 + $0x218] sm:$0x1]
        %v996 = vmul.f32 %v987, 0.17677669
        %v997 = vmul.f32 %v988, 0.17677669
        %v998 = vmul.f32 %v989, 0.17677669
        %v999 = vmul.f32 %v990, 0.17677669
        %v1000 = vmul.f32 %v991, 0.17677669
        %v1001 = vmul.f32 %v992, 0.17677669
        %v1002 = vmul.f32 %v993, 0.17677669
        %v1003 = vmul.f32 %v994, 0.17677669
        %v1004 = vmul.f32 %v995, 0.17677669
        %1014 = vrot.lane.b32.xlu0 %v996, 32
        %v1015 = vpop.permute.xlu0 %1014
        %1016 = vrot.lane.b32.xlu0 %v997, 32
        %v1017 = vpop.permute.xlu0 %1016
        %1018 = vrot.lane.b32.xlu0 %v998, 32
        %v1019 = vpop.permute.xlu0 %1018
        %1020 = vrot.lane.b32.xlu0 %v999, 32
        %v1021 = vpop.permute.xlu0 %1020
        %1022 = vrot.lane.b32.xlu0 %v1000, 32
        %v1023 = vpop.permute.xlu0 %1022
        %1024 = vrot.lane.b32.xlu0 %v1001, 32
        %v1025 = vpop.permute.xlu0 %1024
        %1026 = vrot.lane.b32.xlu0 %v1002, 32
        %v1027 = vpop.permute.xlu0 %1026
        %1028 = vrot.lane.b32.xlu0 %v1003, 32
        %v1029 = vpop.permute.xlu0 %1028
        %1030 = vrot.lane.b32.xlu0 %v1004, 32
        %v1031 = vpop.permute.xlu0 %1030
        %s1041 = scalar_lea.vmem %s167, 1080
        %1042 = vst.msk [vmem:[%s1041] sm:$0xff] %vm188, %v1015
        %1043 = vst.msk [vmem:[%s1041 + $0x8] sm:$0xff] %vm188, %v1017
        %1044 = vst.msk [vmem:[%s1041 + $0x10] sm:$0xff] %vm188, %v1019
        %1045 = vst.msk [vmem:[%s1041 + $0x18] sm:$0xff] %vm188, %v1021
        %1046 = vst.msk [vmem:[%s1041 + $0x20] sm:$0xff] %vm188, %v1023
        %1047 = vst.msk [vmem:[%s1041 + $0x28] sm:$0xff] %vm188, %v1025
        %1048 = vst.msk [vmem:[%s1041 + $0x30] sm:$0xff] %vm188, %v1027
        %1049 = vst.msk [vmem:[%s1041 + $0x38] sm:$0xff] %vm188, %v1029
        %1050 = vst.msk [vmem:[%s1041 + $0x40] sm:$0x1] %vm197, %v1031
        %v1051 = vld [vmem:[%s132 + $0x20] sm:$0xff]
        %v1052 = vld [vmem:[%s132 + $0x60] sm:$0xff]
        %v1053 = vld [vmem:[%s132 + $0xa0] sm:$0xff]
        %v1054 = vld [vmem:[%s132 + $0xe0] sm:$0xff]
        %v1055 = vld [vmem:[%s132 + $0x120] sm:$0xff]
        %v1056 = vld [vmem:[%s132 + $0x160] sm:$0xff]
        %v1057 = vld [vmem:[%s132 + $0x1a0] sm:$0xff]
        %v1058 = vld [vmem:[%s132 + $0x1e0] sm:$0xff]
        %v1059 = vld [vmem:[%s132 + $0x220] sm:$0x1]
        %v1060 = vmul.f32 %v1051, 0.17677669
        %v1061 = vmul.f32 %v1052, 0.17677669
        %v1062 = vmul.f32 %v1053, 0.17677669
        %v1063 = vmul.f32 %v1054, 0.17677669
        %v1064 = vmul.f32 %v1055, 0.17677669
        %v1065 = vmul.f32 %v1056, 0.17677669
        %v1066 = vmul.f32 %v1057, 0.17677669
        %v1067 = vmul.f32 %v1058, 0.17677669
        %v1068 = vmul.f32 %v1059, 0.17677669
        %s1069 = scalar_lea.vmem %s167, 1152
        %1070 = vst.msk [vmem:[%s1069] sm:$0xff] %vm188, %v1060
        %1071 = vst.msk [vmem:[%s1069 + $0x8] sm:$0xff] %vm188, %v1061
        %1072 = vst.msk [vmem:[%s1069 + $0x10] sm:$0xff] %vm188, %v1062
        %1073 = vst.msk [vmem:[%s1069 + $0x18] sm:$0xff] %vm188, %v1063
        %1074 = vst.msk [vmem:[%s1069 + $0x20] sm:$0xff] %vm188, %v1064
        %1075 = vst.msk [vmem:[%s1069 + $0x28] sm:$0xff] %vm188, %v1065
        %1076 = vst.msk [vmem:[%s1069 + $0x30] sm:$0xff] %vm188, %v1066
        %1077 = vst.msk [vmem:[%s1069 + $0x38] sm:$0xff] %vm188, %v1067
        %1078 = vst.msk [vmem:[%s1069 + $0x40] sm:$0x1] %vm197, %v1068
        %v1079 = vld [vmem:[%s132 + $0x20] sm:$0xff]
        %v1080 = vld [vmem:[%s132 + $0x60] sm:$0xff]
        %v1081 = vld [vmem:[%s132 + $0xa0] sm:$0xff]
        %v1082 = vld [vmem:[%s132 + $0xe0] sm:$0xff]
        %v1083 = vld [vmem:[%s132 + $0x120] sm:$0xff]
        %v1084 = vld [vmem:[%s132 + $0x160] sm:$0xff]
        %v1085 = vld [vmem:[%s132 + $0x1a0] sm:$0xff]
        %v1086 = vld [vmem:[%s132 + $0x1e0] sm:$0xff]
        %v1087 = vld [vmem:[%s132 + $0x220] sm:$0x1]
        %v1088 = vmul.f32 %v1079, 0.17677669
        %v1089 = vmul.f32 %v1080, 0.17677669
        %v1090 = vmul.f32 %v1081, 0.17677669
        %v1091 = vmul.f32 %v1082, 0.17677669
        %v1092 = vmul.f32 %v1083, 0.17677669
        %v1093 = vmul.f32 %v1084, 0.17677669
        %v1094 = vmul.f32 %v1085, 0.17677669
        %v1095 = vmul.f32 %v1086, 0.17677669
        %v1096 = vmul.f32 %v1087, 0.17677669
        %1106 = vrot.lane.b32.xlu0 %v1088, 96
        %v1107 = vpop.permute.xlu0 %1106
        %1108 = vrot.lane.b32.xlu0 %v1089, 96
        %v1109 = vpop.permute.xlu0 %1108
        %1110 = vrot.lane.b32.xlu0 %v1090, 96
        %v1111 = vpop.permute.xlu0 %1110
        %1112 = vrot.lane.b32.xlu0 %v1091, 96
        %v1113 = vpop.permute.xlu0 %1112
        %1114 = vrot.lane.b32.xlu0 %v1092, 96
        %v1115 = vpop.permute.xlu0 %1114
        %1116 = vrot.lane.b32.xlu0 %v1093, 96
        %v1117 = vpop.permute.xlu0 %1116
        %1118 = vrot.lane.b32.xlu0 %v1094, 96
        %v1119 = vpop.permute.xlu0 %1118
        %1120 = vrot.lane.b32.xlu0 %v1095, 96
        %v1121 = vpop.permute.xlu0 %1120
        %1122 = vrot.lane.b32.xlu0 %v1096, 96
        %v1123 = vpop.permute.xlu0 %1122
        %s1133 = scalar_lea.vmem %s167, 1224
        %1134 = vst.msk [vmem:[%s1133] sm:$0xff] %vm188, %v1107
        %1135 = vst.msk [vmem:[%s1133 + $0x8] sm:$0xff] %vm188, %v1109
        %1136 = vst.msk [vmem:[%s1133 + $0x10] sm:$0xff] %vm188, %v1111
        %1137 = vst.msk [vmem:[%s1133 + $0x18] sm:$0xff] %vm188, %v1113
        %1138 = vst.msk [vmem:[%s1133 + $0x20] sm:$0xff] %vm188, %v1115
        %1139 = vst.msk [vmem:[%s1133 + $0x28] sm:$0xff] %vm188, %v1117
        %1140 = vst.msk [vmem:[%s1133 + $0x30] sm:$0xff] %vm188, %v1119
        %1141 = vst.msk [vmem:[%s1133 + $0x38] sm:$0xff] %vm188, %v1121
        %1142 = vst.msk [vmem:[%s1133 + $0x40] sm:$0x1] %vm197, %v1123
        %v1143 = vld [vmem:[%s132 + $0x20] sm:$0xff]
        %v1144 = vld [vmem:[%s132 + $0x60] sm:$0xff]
        %v1145 = vld [vmem:[%s132 + $0xa0] sm:$0xff]
        %v1146 = vld [vmem:[%s132 + $0xe0] sm:$0xff]
        %v1147 = vld [vmem:[%s132 + $0x120] sm:$0xff]
        %v1148 = vld [vmem:[%s132 + $0x160] sm:$0xff]
        %v1149 = vld [vmem:[%s132 + $0x1a0] sm:$0xff]
        %v1150 = vld [vmem:[%s132 + $0x1e0] sm:$0xff]
        %v1151 = vld [vmem:[%s132 + $0x220] sm:$0x1]
        %v1152 = vmul.f32 %v1143, 0.17677669
        %v1153 = vmul.f32 %v1144, 0.17677669
        %v1154 = vmul.f32 %v1145, 0.17677669
        %v1155 = vmul.f32 %v1146, 0.17677669
        %v1156 = vmul.f32 %v1147, 0.17677669
        %v1157 = vmul.f32 %v1148, 0.17677669
        %v1158 = vmul.f32 %v1149, 0.17677669
        %v1159 = vmul.f32 %v1150, 0.17677669
        %v1160 = vmul.f32 %v1151, 0.17677669
        %1170 = vrot.lane.b32.xlu0 %v1152, 64
        %v1171 = vpop.permute.xlu0 %1170
        %1172 = vrot.lane.b32.xlu0 %v1153, 64
        %v1173 = vpop.permute.xlu0 %1172
        %1174 = vrot.lane.b32.xlu0 %v1154, 64
        %v1175 = vpop.permute.xlu0 %1174
        %1176 = vrot.lane.b32.xlu0 %v1155, 64
        %v1177 = vpop.permute.xlu0 %1176
        %1178 = vrot.lane.b32.xlu0 %v1156, 64
        %v1179 = vpop.permute.xlu0 %1178
        %1180 = vrot.lane.b32.xlu0 %v1157, 64
        %v1181 = vpop.permute.xlu0 %1180
        %1182 = vrot.lane.b32.xlu0 %v1158, 64
        %v1183 = vpop.permute.xlu0 %1182
        %1184 = vrot.lane.b32.xlu0 %v1159, 64
        %v1185 = vpop.permute.xlu0 %1184
        %1186 = vrot.lane.b32.xlu0 %v1160, 64
        %v1187 = vpop.permute.xlu0 %1186
        %s1197 = scalar_lea.vmem %s167, 1296
        %1198 = vst.msk [vmem:[%s1197] sm:$0xff] %vm188, %v1171
        %1199 = vst.msk [vmem:[%s1197 + $0x8] sm:$0xff] %vm188, %v1173
        %1200 = vst.msk [vmem:[%s1197 + $0x10] sm:$0xff] %vm188, %v1175
        %1201 = vst.msk [vmem:[%s1197 + $0x18] sm:$0xff] %vm188, %v1177
        %1202 = vst.msk [vmem:[%s1197 + $0x20] sm:$0xff] %vm188, %v1179
        %1203 = vst.msk [vmem:[%s1197 + $0x28] sm:$0xff] %vm188, %v1181
        %1204 = vst.msk [vmem:[%s1197 + $0x30] sm:$0xff] %vm188, %v1183
        %1205 = vst.msk [vmem:[%s1197 + $0x38] sm:$0xff] %vm188, %v1185
        %1206 = vst.msk [vmem:[%s1197 + $0x40] sm:$0x1] %vm197, %v1187
        %v1207 = vld [vmem:[%s132 + $0x20] sm:$0xff]
        %v1208 = vld [vmem:[%s132 + $0x60] sm:$0xff]
        %v1209 = vld [vmem:[%s132 + $0xa0] sm:$0xff]
        %v1210 = vld [vmem:[%s132 + $0xe0] sm:$0xff]
        %v1211 = vld [vmem:[%s132 + $0x120] sm:$0xff]
        %v1212 = vld [vmem:[%s132 + $0x160] sm:$0xff]
        %v1213 = vld [vmem:[%s132 + $0x1a0] sm:$0xff]
        %v1214 = vld [vmem:[%s132 + $0x1e0] sm:$0xff]
        %v1215 = vld [vmem:[%s132 + $0x220] sm:$0x1]
        %v1216 = vmul.f32 %v1207, 0.17677669
        %v1217 = vmul.f32 %v1208, 0.17677669
        %v1218 = vmul.f32 %v1209, 0.17677669
        %v1219 = vmul.f32 %v1210, 0.17677669
        %v1220 = vmul.f32 %v1211, 0.17677669
        %v1221 = vmul.f32 %v1212, 0.17677669
        %v1222 = vmul.f32 %v1213, 0.17677669
        %v1223 = vmul.f32 %v1214, 0.17677669
        %v1224 = vmul.f32 %v1215, 0.17677669
        %1234 = vrot.lane.b32.xlu0 %v1216, 32
        %v1235 = vpop.permute.xlu0 %1234
        %1236 = vrot.lane.b32.xlu0 %v1217, 32
        %v1237 = vpop.permute.xlu0 %1236
        %1238 = vrot.lane.b32.xlu0 %v1218, 32
        %v1239 = vpop.permute.xlu0 %1238
        %1240 = vrot.lane.b32.xlu0 %v1219, 32
        %v1241 = vpop.permute.xlu0 %1240
        %1242 = vrot.lane.b32.xlu0 %v1220, 32
        %v1243 = vpop.permute.xlu0 %1242
        %1244 = vrot.lane.b32.xlu0 %v1221, 32
        %v1245 = vpop.permute.xlu0 %1244
        %1246 = vrot.lane.b32.xlu0 %v1222, 32
        %v1247 = vpop.permute.xlu0 %1246
        %1248 = vrot.lane.b32.xlu0 %v1223, 32
        %v1249 = vpop.permute.xlu0 %1248
        %1250 = vrot.lane.b32.xlu0 %v1224, 32
        %v1251 = vpop.permute.xlu0 %1250
        %s1261 = scalar_lea.vmem %s167, 1368
        %1262 = vst.msk [vmem:[%s1261] sm:$0xff] %vm188, %v1235
        %1263 = vst.msk [vmem:[%s1261 + $0x8] sm:$0xff] %vm188, %v1237
        %1264 = vst.msk [vmem:[%s1261 + $0x10] sm:$0xff] %vm188, %v1239
        %1265 = vst.msk [vmem:[%s1261 + $0x18] sm:$0xff] %vm188, %v1241
        %1266 = vst.msk [vmem:[%s1261 + $0x20] sm:$0xff] %vm188, %v1243
        %1267 = vst.msk [vmem:[%s1261 + $0x28] sm:$0xff] %vm188, %v1245
        %1268 = vst.msk [vmem:[%s1261 + $0x30] sm:$0xff] %vm188, %v1247
        %1269 = vst.msk [vmem:[%s1261 + $0x38] sm:$0xff] %vm188, %v1249
        %1270 = vst.msk [vmem:[%s1261 + $0x40] sm:$0x1] %vm197, %v1251
        %v1271 = vld [vmem:[%s132 + $0x28] sm:$0xff]
        %v1272 = vld [vmem:[%s132 + $0x68] sm:$0xff]
        %v1273 = vld [vmem:[%s132 + $0xa8] sm:$0xff]
        %v1274 = vld [vmem:[%s132 + $0xe8] sm:$0xff]
        %v1275 = vld [vmem:[%s132 + $0x128] sm:$0xff]
        %v1276 = vld [vmem:[%s132 + $0x168] sm:$0xff]
        %v1277 = vld [vmem:[%s132 + $0x1a8] sm:$0xff]
        %v1278 = vld [vmem:[%s132 + $0x1e8] sm:$0xff]
        %v1279 = vld [vmem:[%s132 + $0x228] sm:$0x1]
        %v1280 = vmul.f32 %v1271, 0.17677669
        %v1281 = vmul.f32 %v1272, 0.17677669
        %v1282 = vmul.f32 %v1273, 0.17677669
        %v1283 = vmul.f32 %v1274, 0.17677669
        %v1284 = vmul.f32 %v1275, 0.17677669
        %v1285 = vmul.f32 %v1276, 0.17677669
        %v1286 = vmul.f32 %v1277, 0.17677669
        %v1287 = vmul.f32 %v1278, 0.17677669
        %v1288 = vmul.f32 %v1279, 0.17677669
        %s1289 = scalar_lea.vmem %s167, 1440
        %1290 = vst.msk [vmem:[%s1289] sm:$0xff] %vm188, %v1280
        %1291 = vst.msk [vmem:[%s1289 + $0x8] sm:$0xff] %vm188, %v1281
        %1292 = vst.msk [vmem:[%s1289 + $0x10] sm:$0xff] %vm188, %v1282
        %1293 = vst.msk [vmem:[%s1289 + $0x18] sm:$0xff] %vm188, %v1283
        %1294 = vst.msk [vmem:[%s1289 + $0x20] sm:$0xff] %vm188, %v1284
        %1295 = vst.msk [vmem:[%s1289 + $0x28] sm:$0xff] %vm188, %v1285
        %1296 = vst.msk [vmem:[%s1289 + $0x30] sm:$0xff] %vm188, %v1286
        %1297 = vst.msk [vmem:[%s1289 + $0x38] sm:$0xff] %vm188, %v1287
        %1298 = vst.msk [vmem:[%s1289 + $0x40] sm:$0x1] %vm197, %v1288
        %v1299 = vld [vmem:[%s132 + $0x28] sm:$0xff]
        %v1300 = vld [vmem:[%s132 + $0x68] sm:$0xff]
        %v1301 = vld [vmem:[%s132 + $0xa8] sm:$0xff]
        %v1302 = vld [vmem:[%s132 + $0xe8] sm:$0xff]
        %v1303 = vld [vmem:[%s132 + $0x128] sm:$0xff]
        %v1304 = vld [vmem:[%s132 + $0x168] sm:$0xff]
        %v1305 = vld [vmem:[%s132 + $0x1a8] sm:$0xff]
        %v1306 = vld [vmem:[%s132 + $0x1e8] sm:$0xff]
        %v1307 = vld [vmem:[%s132 + $0x228] sm:$0x1]
        %v1308 = vmul.f32 %v1299, 0.17677669
        %v1309 = vmul.f32 %v1300, 0.17677669
        %v1310 = vmul.f32 %v1301, 0.17677669
        %v1311 = vmul.f32 %v1302, 0.17677669
        %v1312 = vmul.f32 %v1303, 0.17677669
        %v1313 = vmul.f32 %v1304, 0.17677669
        %v1314 = vmul.f32 %v1305, 0.17677669
        %v1315 = vmul.f32 %v1306, 0.17677669
        %v1316 = vmul.f32 %v1307, 0.17677669
        %1326 = vrot.lane.b32.xlu0 %v1308, 96
        %v1327 = vpop.permute.xlu0 %1326
        %1328 = vrot.lane.b32.xlu0 %v1309, 96
        %v1329 = vpop.permute.xlu0 %1328
        %1330 = vrot.lane.b32.xlu0 %v1310, 96
        %v1331 = vpop.permute.xlu0 %1330
        %1332 = vrot.lane.b32.xlu0 %v1311, 96
        %v1333 = vpop.permute.xlu0 %1332
        %1334 = vrot.lane.b32.xlu0 %v1312, 96
        %v1335 = vpop.permute.xlu0 %1334
        %1336 = vrot.lane.b32.xlu0 %v1313, 96
        %v1337 = vpop.permute.xlu0 %1336
        %1338 = vrot.lane.b32.xlu0 %v1314, 96
        %v1339 = vpop.permute.xlu0 %1338
        %1340 = vrot.lane.b32.xlu0 %v1315, 96
        %v1341 = vpop.permute.xlu0 %1340
        %1342 = vrot.lane.b32.xlu0 %v1316, 96
        %v1343 = vpop.permute.xlu0 %1342
        %s1353 = scalar_lea.vmem %s167, 1512
        %1354 = vst.msk [vmem:[%s1353] sm:$0xff] %vm188, %v1327
        %1355 = vst.msk [vmem:[%s1353 + $0x8] sm:$0xff] %vm188, %v1329
        %1356 = vst.msk [vmem:[%s1353 + $0x10] sm:$0xff] %vm188, %v1331
        %1357 = vst.msk [vmem:[%s1353 + $0x18] sm:$0xff] %vm188, %v1333
        %1358 = vst.msk [vmem:[%s1353 + $0x20] sm:$0xff] %vm188, %v1335
        %1359 = vst.msk [vmem:[%s1353 + $0x28] sm:$0xff] %vm188, %v1337
        %1360 = vst.msk [vmem:[%s1353 + $0x30] sm:$0xff] %vm188, %v1339
        %1361 = vst.msk [vmem:[%s1353 + $0x38] sm:$0xff] %vm188, %v1341
        %1362 = vst.msk [vmem:[%s1353 + $0x40] sm:$0x1] %vm197, %v1343
        %v1363 = vld [vmem:[%s132 + $0x28] sm:$0xff]
        %v1364 = vld [vmem:[%s132 + $0x68] sm:$0xff]
        %v1365 = vld [vmem:[%s132 + $0xa8] sm:$0xff]
        %v1366 = vld [vmem:[%s132 + $0xe8] sm:$0xff]
        %v1367 = vld [vmem:[%s132 + $0x128] sm:$0xff]
        %v1368 = vld [vmem:[%s132 + $0x168] sm:$0xff]
        %v1369 = vld [vmem:[%s132 + $0x1a8] sm:$0xff]
        %v1370 = vld [vmem:[%s132 + $0x1e8] sm:$0xff]
        %v1371 = vld [vmem:[%s132 + $0x228] sm:$0x1]
        %v1372 = vmul.f32 %v1363, 0.17677669
        %v1373 = vmul.f32 %v1364, 0.17677669
        %v1374 = vmul.f32 %v1365, 0.17677669
        %v1375 = vmul.f32 %v1366, 0.17677669
        %v1376 = vmul.f32 %v1367, 0.17677669
        %v1377 = vmul.f32 %v1368, 0.17677669
        %v1378 = vmul.f32 %v1369, 0.17677669
        %v1379 = vmul.f32 %v1370, 0.17677669
        %v1380 = vmul.f32 %v1371, 0.17677669
        %1390 = vrot.lane.b32.xlu0 %v1372, 64
        %v1391 = vpop.permute.xlu0 %1390
        %1392 = vrot.lane.b32.xlu0 %v1373, 64
        %v1393 = vpop.permute.xlu0 %1392
        %1394 = vrot.lane.b32.xlu0 %v1374, 64
        %v1395 = vpop.permute.xlu0 %1394
        %1396 = vrot.lane.b32.xlu0 %v1375, 64
        %v1397 = vpop.permute.xlu0 %1396
        %1398 = vrot.lane.b32.xlu0 %v1376, 64
        %v1399 = vpop.permute.xlu0 %1398
        %1400 = vrot.lane.b32.xlu0 %v1377, 64
        %v1401 = vpop.permute.xlu0 %1400
        %1402 = vrot.lane.b32.xlu0 %v1378, 64
        %v1403 = vpop.permute.xlu0 %1402
        %1404 = vrot.lane.b32.xlu0 %v1379, 64
        %v1405 = vpop.permute.xlu0 %1404
        %1406 = vrot.lane.b32.xlu0 %v1380, 64
        %v1407 = vpop.permute.xlu0 %1406
        %s1417 = scalar_lea.vmem %s167, 1584
        %1418 = vst.msk [vmem:[%s1417] sm:$0xff] %vm188, %v1391
        %1419 = vst.msk [vmem:[%s1417 + $0x8] sm:$0xff] %vm188, %v1393
        %1420 = vst.msk [vmem:[%s1417 + $0x10] sm:$0xff] %vm188, %v1395
        %1421 = vst.msk [vmem:[%s1417 + $0x18] sm:$0xff] %vm188, %v1397
        %1422 = vst.msk [vmem:[%s1417 + $0x20] sm:$0xff] %vm188, %v1399
        %1423 = vst.msk [vmem:[%s1417 + $0x28] sm:$0xff] %vm188, %v1401
        %1424 = vst.msk [vmem:[%s1417 + $0x30] sm:$0xff] %vm188, %v1403
        %1425 = vst.msk [vmem:[%s1417 + $0x38] sm:$0xff] %vm188, %v1405
        %1426 = vst.msk [vmem:[%s1417 + $0x40] sm:$0x1] %vm197, %v1407
        %v1427 = vld [vmem:[%s132 + $0x28] sm:$0xff]
        %v1428 = vld [vmem:[%s132 + $0x68] sm:$0xff]
        %v1429 = vld [vmem:[%s132 + $0xa8] sm:$0xff]
        %v1430 = vld [vmem:[%s132 + $0xe8] sm:$0xff]
        %v1431 = vld [vmem:[%s132 + $0x128] sm:$0xff]
        %v1432 = vld [vmem:[%s132 + $0x168] sm:$0xff]
        %v1433 = vld [vmem:[%s132 + $0x1a8] sm:$0xff]
        %v1434 = vld [vmem:[%s132 + $0x1e8] sm:$0xff]
        %v1435 = vld [vmem:[%s132 + $0x228] sm:$0x1]
        %v1436 = vmul.f32 %v1427, 0.17677669
        %v1437 = vmul.f32 %v1428, 0.17677669
        %v1438 = vmul.f32 %v1429, 0.17677669
        %v1439 = vmul.f32 %v1430, 0.17677669
        %v1440 = vmul.f32 %v1431, 0.17677669
        %v1441 = vmul.f32 %v1432, 0.17677669
        %v1442 = vmul.f32 %v1433, 0.17677669
        %v1443 = vmul.f32 %v1434, 0.17677669
        %v1444 = vmul.f32 %v1435, 0.17677669
        %1454 = vrot.lane.b32.xlu0 %v1436, 32
        %v1455 = vpop.permute.xlu0 %1454
        %1456 = vrot.lane.b32.xlu0 %v1437, 32
        %v1457 = vpop.permute.xlu0 %1456
        %1458 = vrot.lane.b32.xlu0 %v1438, 32
        %v1459 = vpop.permute.xlu0 %1458
        %1460 = vrot.lane.b32.xlu0 %v1439, 32
        %v1461 = vpop.permute.xlu0 %1460
        %1462 = vrot.lane.b32.xlu0 %v1440, 32
        %v1463 = vpop.permute.xlu0 %1462
        %1464 = vrot.lane.b32.xlu0 %v1441, 32
        %v1465 = vpop.permute.xlu0 %1464
        %1466 = vrot.lane.b32.xlu0 %v1442, 32
        %v1467 = vpop.permute.xlu0 %1466
        %1468 = vrot.lane.b32.xlu0 %v1443, 32
        %v1469 = vpop.permute.xlu0 %1468
        %1470 = vrot.lane.b32.xlu0 %v1444, 32
        %v1471 = vpop.permute.xlu0 %1470
        %s1481 = scalar_lea.vmem %s167, 1656
        %1482 = vst.msk [vmem:[%s1481] sm:$0xff] %vm188, %v1455
        %1483 = vst.msk [vmem:[%s1481 + $0x8] sm:$0xff] %vm188, %v1457
        %1484 = vst.msk [vmem:[%s1481 + $0x10] sm:$0xff] %vm188, %v1459
        %1485 = vst.msk [vmem:[%s1481 + $0x18] sm:$0xff] %vm188, %v1461
        %1486 = vst.msk [vmem:[%s1481 + $0x20] sm:$0xff] %vm188, %v1463
        %1487 = vst.msk [vmem:[%s1481 + $0x28] sm:$0xff] %vm188, %v1465
        %1488 = vst.msk [vmem:[%s1481 + $0x30] sm:$0xff] %vm188, %v1467
        %1489 = vst.msk [vmem:[%s1481 + $0x38] sm:$0xff] %vm188, %v1469
        %1490 = vst.msk [vmem:[%s1481 + $0x40] sm:$0x1] %vm197, %v1471
        %v1491 = vld [vmem:[%s132 + $0x30] sm:$0xff]
        %v1492 = vld [vmem:[%s132 + $0x70] sm:$0xff]
        %v1493 = vld [vmem:[%s132 + $0xb0] sm:$0xff]
        %v1494 = vld [vmem:[%s132 + $0xf0] sm:$0xff]
        %v1495 = vld [vmem:[%s132 + $0x130] sm:$0xff]
        %v1496 = vld [vmem:[%s132 + $0x170] sm:$0xff]
        %v1497 = vld [vmem:[%s132 + $0x1b0] sm:$0xff]
        %v1498 = vld [vmem:[%s132 + $0x1f0] sm:$0xff]
        %v1499 = vld [vmem:[%s132 + $0x230] sm:$0x1]
        %v1500 = vmul.f32 %v1491, 0.17677669
        %v1501 = vmul.f32 %v1492, 0.17677669
        %v1502 = vmul.f32 %v1493, 0.17677669
        %v1503 = vmul.f32 %v1494, 0.17677669
        %v1504 = vmul.f32 %v1495, 0.17677669
        %v1505 = vmul.f32 %v1496, 0.17677669
        %v1506 = vmul.f32 %v1497, 0.17677669
        %v1507 = vmul.f32 %v1498, 0.17677669
        %v1508 = vmul.f32 %v1499, 0.17677669
        %s1509 = scalar_lea.vmem %s167, 1728
        %1510 = vst.msk [vmem:[%s1509] sm:$0xff] %vm188, %v1500
        %1511 = vst.msk [vmem:[%s1509 + $0x8] sm:$0xff] %vm188, %v1501
        %1512 = vst.msk [vmem:[%s1509 + $0x10] sm:$0xff] %vm188, %v1502
        %1513 = vst.msk [vmem:[%s1509 + $0x18] sm:$0xff] %vm188, %v1503
        %1514 = vst.msk [vmem:[%s1509 + $0x20] sm:$0xff] %vm188, %v1504
        %1515 = vst.msk [vmem:[%s1509 + $0x28] sm:$0xff] %vm188, %v1505
        %1516 = vst.msk [vmem:[%s1509 + $0x30] sm:$0xff] %vm188, %v1506
        %1517 = vst.msk [vmem:[%s1509 + $0x38] sm:$0xff] %vm188, %v1507
        %1518 = vst.msk [vmem:[%s1509 + $0x40] sm:$0x1] %vm197, %v1508
        %v1519 = vld [vmem:[%s132 + $0x30] sm:$0xff]
        %v1520 = vld [vmem:[%s132 + $0x70] sm:$0xff]
        %v1521 = vld [vmem:[%s132 + $0xb0] sm:$0xff]
        %v1522 = vld [vmem:[%s132 + $0xf0] sm:$0xff]
        %v1523 = vld [vmem:[%s132 + $0x130] sm:$0xff]
        %v1524 = vld [vmem:[%s132 + $0x170] sm:$0xff]
        %v1525 = vld [vmem:[%s132 + $0x1b0] sm:$0xff]
        %v1526 = vld [vmem:[%s132 + $0x1f0] sm:$0xff]
        %v1527 = vld [vmem:[%s132 + $0x230] sm:$0x1]
        %v1528 = vmul.f32 %v1519, 0.17677669
        %v1529 = vmul.f32 %v1520, 0.17677669
        %v1530 = vmul.f32 %v1521, 0.17677669
        %v1531 = vmul.f32 %v1522, 0.17677669
        %v1532 = vmul.f32 %v1523, 0.17677669
        %v1533 = vmul.f32 %v1524, 0.17677669
        %v1534 = vmul.f32 %v1525, 0.17677669
        %v1535 = vmul.f32 %v1526, 0.17677669
        %v1536 = vmul.f32 %v1527, 0.17677669
        %1546 = vrot.lane.b32.xlu0 %v1528, 96
        %v1547 = vpop.permute.xlu0 %1546
        %1548 = vrot.lane.b32.xlu0 %v1529, 96
        %v1549 = vpop.permute.xlu0 %1548
        %1550 = vrot.lane.b32.xlu0 %v1530, 96
        %v1551 = vpop.permute.xlu0 %1550
        %1552 = vrot.lane.b32.xlu0 %v1531, 96
        %v1553 = vpop.permute.xlu0 %1552
        %1554 = vrot.lane.b32.xlu0 %v1532, 96
        %v1555 = vpop.permute.xlu0 %1554
        %1556 = vrot.lane.b32.xlu0 %v1533, 96
        %v1557 = vpop.permute.xlu0 %1556
        %1558 = vrot.lane.b32.xlu0 %v1534, 96
        %v1559 = vpop.permute.xlu0 %1558
        %1560 = vrot.lane.b32.xlu0 %v1535, 96
        %v1561 = vpop.permute.xlu0 %1560
        %1562 = vrot.lane.b32.xlu0 %v1536, 96
        %v1563 = vpop.permute.xlu0 %1562
        %s1573 = scalar_lea.vmem %s167, 1800
        %1574 = vst.msk [vmem:[%s1573] sm:$0xff] %vm188, %v1547
        %1575 = vst.msk [vmem:[%s1573 + $0x8] sm:$0xff] %vm188, %v1549
        %1576 = vst.msk [vmem:[%s1573 + $0x10] sm:$0xff] %vm188, %v1551
        %1577 = vst.msk [vmem:[%s1573 + $0x18] sm:$0xff] %vm188, %v1553
        %1578 = vst.msk [vmem:[%s1573 + $0x20] sm:$0xff] %vm188, %v1555
        %1579 = vst.msk [vmem:[%s1573 + $0x28] sm:$0xff] %vm188, %v1557
        %1580 = vst.msk [vmem:[%s1573 + $0x30] sm:$0xff] %vm188, %v1559
        %1581 = vst.msk [vmem:[%s1573 + $0x38] sm:$0xff] %vm188, %v1561
        %1582 = vst.msk [vmem:[%s1573 + $0x40] sm:$0x1] %vm197, %v1563
        %v1583 = vld [vmem:[%s132 + $0x30] sm:$0xff]
        %v1584 = vld [vmem:[%s132 + $0x70] sm:$0xff]
        %v1585 = vld [vmem:[%s132 + $0xb0] sm:$0xff]
        %v1586 = vld [vmem:[%s132 + $0xf0] sm:$0xff]
        %v1587 = vld [vmem:[%s132 + $0x130] sm:$0xff]
        %v1588 = vld [vmem:[%s132 + $0x170] sm:$0xff]
        %v1589 = vld [vmem:[%s132 + $0x1b0] sm:$0xff]
        %v1590 = vld [vmem:[%s132 + $0x1f0] sm:$0xff]
        %v1591 = vld [vmem:[%s132 + $0x230] sm:$0x1]
        %v1592 = vmul.f32 %v1583, 0.17677669
        %v1593 = vmul.f32 %v1584, 0.17677669
        %v1594 = vmul.f32 %v1585, 0.17677669
        %v1595 = vmul.f32 %v1586, 0.17677669
        %v1596 = vmul.f32 %v1587, 0.17677669
        %v1597 = vmul.f32 %v1588, 0.17677669
        %v1598 = vmul.f32 %v1589, 0.17677669
        %v1599 = vmul.f32 %v1590, 0.17677669
        %v1600 = vmul.f32 %v1591, 0.17677669
        %1610 = vrot.lane.b32.xlu0 %v1592, 64
        %v1611 = vpop.permute.xlu0 %1610
        %1612 = vrot.lane.b32.xlu0 %v1593, 64
        %v1613 = vpop.permute.xlu0 %1612
        %1614 = vrot.lane.b32.xlu0 %v1594, 64
        %v1615 = vpop.permute.xlu0 %1614
        %1616 = vrot.lane.b32.xlu0 %v1595, 64
        %v1617 = vpop.permute.xlu0 %1616
        %1618 = vrot.lane.b32.xlu0 %v1596, 64
        %v1619 = vpop.permute.xlu0 %1618
        %1620 = vrot.lane.b32.xlu0 %v1597, 64
        %v1621 = vpop.permute.xlu0 %1620
        %1622 = vrot.lane.b32.xlu0 %v1598, 64
        %v1623 = vpop.permute.xlu0 %1622
        %1624 = vrot.lane.b32.xlu0 %v1599, 64
        %v1625 = vpop.permute.xlu0 %1624
        %1626 = vrot.lane.b32.xlu0 %v1600, 64
        %v1627 = vpop.permute.xlu0 %1626
        %s1637 = scalar_lea.vmem %s167, 1872
        %1638 = vst.msk [vmem:[%s1637] sm:$0xff] %vm188, %v1611
        %1639 = vst.msk [vmem:[%s1637 + $0x8] sm:$0xff] %vm188, %v1613
        %1640 = vst.msk [vmem:[%s1637 + $0x10] sm:$0xff] %vm188, %v1615
        %1641 = vst.msk [vmem:[%s1637 + $0x18] sm:$0xff] %vm188, %v1617
        %1642 = vst.msk [vmem:[%s1637 + $0x20] sm:$0xff] %vm188, %v1619
        %1643 = vst.msk [vmem:[%s1637 + $0x28] sm:$0xff] %vm188, %v1621
        %1644 = vst.msk [vmem:[%s1637 + $0x30] sm:$0xff] %vm188, %v1623
        %1645 = vst.msk [vmem:[%s1637 + $0x38] sm:$0xff] %vm188, %v1625
        %1646 = vst.msk [vmem:[%s1637 + $0x40] sm:$0x1] %vm197, %v1627
        %v1647 = vld [vmem:[%s132 + $0x30] sm:$0xff]
        %v1648 = vld [vmem:[%s132 + $0x70] sm:$0xff]
        %v1649 = vld [vmem:[%s132 + $0xb0] sm:$0xff]
        %v1650 = vld [vmem:[%s132 + $0xf0] sm:$0xff]
        %v1651 = vld [vmem:[%s132 + $0x130] sm:$0xff]
        %v1652 = vld [vmem:[%s132 + $0x170] sm:$0xff]
        %v1653 = vld [vmem:[%s132 + $0x1b0] sm:$0xff]
        %v1654 = vld [vmem:[%s132 + $0x1f0] sm:$0xff]
        %v1655 = vld [vmem:[%s132 + $0x230] sm:$0x1]
        %v1656 = vmul.f32 %v1647, 0.17677669
        %v1657 = vmul.f32 %v1648, 0.17677669
        %v1658 = vmul.f32 %v1649, 0.17677669
        %v1659 = vmul.f32 %v1650, 0.17677669
        %v1660 = vmul.f32 %v1651, 0.17677669
        %v1661 = vmul.f32 %v1652, 0.17677669
        %v1662 = vmul.f32 %v1653, 0.17677669
        %v1663 = vmul.f32 %v1654, 0.17677669
        %v1664 = vmul.f32 %v1655, 0.17677669
        %1674 = vrot.lane.b32.xlu0 %v1656, 32
        %v1675 = vpop.permute.xlu0 %1674
        %1676 = vrot.lane.b32.xlu0 %v1657, 32
        %v1677 = vpop.permute.xlu0 %1676
        %1678 = vrot.lane.b32.xlu0 %v1658, 32
        %v1679 = vpop.permute.xlu0 %1678
        %1680 = vrot.lane.b32.xlu0 %v1659, 32
        %v1681 = vpop.permute.xlu0 %1680
        %1682 = vrot.lane.b32.xlu0 %v1660, 32
        %v1683 = vpop.permute.xlu0 %1682
        %1684 = vrot.lane.b32.xlu0 %v1661, 32
        %v1685 = vpop.permute.xlu0 %1684
        %1686 = vrot.lane.b32.xlu0 %v1662, 32
        %v1687 = vpop.permute.xlu0 %1686
        %1688 = vrot.lane.b32.xlu0 %v1663, 32
        %v1689 = vpop.permute.xlu0 %1688
        %1690 = vrot.lane.b32.xlu0 %v1664, 32
        %v1691 = vpop.permute.xlu0 %1690
        %s1701 = scalar_lea.vmem %s167, 1944
        %1702 = vst.msk [vmem:[%s1701] sm:$0xff] %vm188, %v1675
        %1703 = vst.msk [vmem:[%s1701 + $0x8] sm:$0xff] %vm188, %v1677
        %1704 = vst.msk [vmem:[%s1701 + $0x10] sm:$0xff] %vm188, %v1679
        %1705 = vst.msk [vmem:[%s1701 + $0x18] sm:$0xff] %vm188, %v1681
        %1706 = vst.msk [vmem:[%s1701 + $0x20] sm:$0xff] %vm188, %v1683
        %1707 = vst.msk [vmem:[%s1701 + $0x28] sm:$0xff] %vm188, %v1685
        %1708 = vst.msk [vmem:[%s1701 + $0x30] sm:$0xff] %vm188, %v1687
        %1709 = vst.msk [vmem:[%s1701 + $0x38] sm:$0xff] %vm188, %v1689
        %1710 = vst.msk [vmem:[%s1701 + $0x40] sm:$0x1] %vm197, %v1691
        %v1711 = vld [vmem:[%s132 + $0x38] sm:$0xff]
        %v1712 = vld [vmem:[%s132 + $0x78] sm:$0xff]
        %v1713 = vld [vmem:[%s132 + $0xb8] sm:$0xff]
        %v1714 = vld [vmem:[%s132 + $0xf8] sm:$0xff]
        %v1715 = vld [vmem:[%s132 + $0x138] sm:$0xff]
        %v1716 = vld [vmem:[%s132 + $0x178] sm:$0xff]
        %v1717 = vld [vmem:[%s132 + $0x1b8] sm:$0xff]
        %v1718 = vld [vmem:[%s132 + $0x1f8] sm:$0xff]
        %v1719 = vld [vmem:[%s132 + $0x238] sm:$0x1]
        %v1720 = vmul.f32 %v1711, 0.17677669
        %v1721 = vmul.f32 %v1712, 0.17677669
        %v1722 = vmul.f32 %v1713, 0.17677669
        %v1723 = vmul.f32 %v1714, 0.17677669
        %v1724 = vmul.f32 %v1715, 0.17677669
        %v1725 = vmul.f32 %v1716, 0.17677669
        %v1726 = vmul.f32 %v1717, 0.17677669
        %v1727 = vmul.f32 %v1718, 0.17677669
        %v1728 = vmul.f32 %v1719, 0.17677669
        %s1729 = scalar_lea.vmem %s167, 2016
        %1730 = vst.msk [vmem:[%s1729] sm:$0xff] %vm188, %v1720
        %1731 = vst.msk [vmem:[%s1729 + $0x8] sm:$0xff] %vm188, %v1721
        %1732 = vst.msk [vmem:[%s1729 + $0x10] sm:$0xff] %vm188, %v1722
        %1733 = vst.msk [vmem:[%s1729 + $0x18] sm:$0xff] %vm188, %v1723
        %1734 = vst.msk [vmem:[%s1729 + $0x20] sm:$0xff] %vm188, %v1724
        %1735 = vst.msk [vmem:[%s1729 + $0x28] sm:$0xff] %vm188, %v1725
        %1736 = vst.msk [vmem:[%s1729 + $0x30] sm:$0xff] %vm188, %v1726
        %1737 = vst.msk [vmem:[%s1729 + $0x38] sm:$0xff] %vm188, %v1727
        %1738 = vst.msk [vmem:[%s1729 + $0x40] sm:$0x1] %vm197, %v1728
        %v1739 = vld [vmem:[%s132 + $0x38] sm:$0xff]
        %v1740 = vld [vmem:[%s132 + $0x78] sm:$0xff]
        %v1741 = vld [vmem:[%s132 + $0xb8] sm:$0xff]
        %v1742 = vld [vmem:[%s132 + $0xf8] sm:$0xff]
        %v1743 = vld [vmem:[%s132 + $0x138] sm:$0xff]
        %v1744 = vld [vmem:[%s132 + $0x178] sm:$0xff]
        %v1745 = vld [vmem:[%s132 + $0x1b8] sm:$0xff]
        %v1746 = vld [vmem:[%s132 + $0x1f8] sm:$0xff]
        %v1747 = vld [vmem:[%s132 + $0x238] sm:$0x1]
        %v1748 = vmul.f32 %v1739, 0.17677669
        %v1749 = vmul.f32 %v1740, 0.17677669
        %v1750 = vmul.f32 %v1741, 0.17677669
        %v1751 = vmul.f32 %v1742, 0.17677669
        %v1752 = vmul.f32 %v1743, 0.17677669
        %v1753 = vmul.f32 %v1744, 0.17677669
        %v1754 = vmul.f32 %v1745, 0.17677669
        %v1755 = vmul.f32 %v1746, 0.17677669
        %v1756 = vmul.f32 %v1747, 0.17677669
        %1766 = vrot.lane.b32.xlu0 %v1748, 96
        %v1767 = vpop.permute.xlu0 %1766
        %1768 = vrot.lane.b32.xlu0 %v1749, 96
        %v1769 = vpop.permute.xlu0 %1768
        %1770 = vrot.lane.b32.xlu0 %v1750, 96
        %v1771 = vpop.permute.xlu0 %1770
        %1772 = vrot.lane.b32.xlu0 %v1751, 96
        %v1773 = vpop.permute.xlu0 %1772
        %1774 = vrot.lane.b32.xlu0 %v1752, 96
        %v1775 = vpop.permute.xlu0 %1774
        %1776 = vrot.lane.b32.xlu0 %v1753, 96
        %v1777 = vpop.permute.xlu0 %1776
        %1778 = vrot.lane.b32.xlu0 %v1754, 96
        %v1779 = vpop.permute.xlu0 %1778
        %1780 = vrot.lane.b32.xlu0 %v1755, 96
        %v1781 = vpop.permute.xlu0 %1780
        %1782 = vrot.lane.b32.xlu0 %v1756, 96
        %v1783 = vpop.permute.xlu0 %1782
        %s1793 = scalar_lea.vmem %s167, 2088
        %1794 = vst.msk [vmem:[%s1793] sm:$0xff] %vm188, %v1767
        %1795 = vst.msk [vmem:[%s1793 + $0x8] sm:$0xff] %vm188, %v1769
        %1796 = vst.msk [vmem:[%s1793 + $0x10] sm:$0xff] %vm188, %v1771
        %1797 = vst.msk [vmem:[%s1793 + $0x18] sm:$0xff] %vm188, %v1773
        %1798 = vst.msk [vmem:[%s1793 + $0x20] sm:$0xff] %vm188, %v1775
        %1799 = vst.msk [vmem:[%s1793 + $0x28] sm:$0xff] %vm188, %v1777
        %1800 = vst.msk [vmem:[%s1793 + $0x30] sm:$0xff] %vm188, %v1779
        %1801 = vst.msk [vmem:[%s1793 + $0x38] sm:$0xff] %vm188, %v1781
        %1802 = vst.msk [vmem:[%s1793 + $0x40] sm:$0x1] %vm197, %v1783
        %v1803 = vld [vmem:[%s132 + $0x38] sm:$0xff]
        %v1804 = vld [vmem:[%s132 + $0x78] sm:$0xff]
        %v1805 = vld [vmem:[%s132 + $0xb8] sm:$0xff]
        %v1806 = vld [vmem:[%s132 + $0xf8] sm:$0xff]
        %v1807 = vld [vmem:[%s132 + $0x138] sm:$0xff]
        %v1808 = vld [vmem:[%s132 + $0x178] sm:$0xff]
        %v1809 = vld [vmem:[%s132 + $0x1b8] sm:$0xff]
        %v1810 = vld [vmem:[%s132 + $0x1f8] sm:$0xff]
        %v1811 = vld [vmem:[%s132 + $0x238] sm:$0x1]
        %v1812 = vmul.f32 %v1803, 0.17677669
        %v1813 = vmul.f32 %v1804, 0.17677669
        %v1814 = vmul.f32 %v1805, 0.17677669
        %v1815 = vmul.f32 %v1806, 0.17677669
        %v1816 = vmul.f32 %v1807, 0.17677669
        %v1817 = vmul.f32 %v1808, 0.17677669
        %v1818 = vmul.f32 %v1809, 0.17677669
        %v1819 = vmul.f32 %v1810, 0.17677669
        %v1820 = vmul.f32 %v1811, 0.17677669
        %1830 = vrot.lane.b32.xlu0 %v1812, 64
        %v1831 = vpop.permute.xlu0 %1830
        %1832 = vrot.lane.b32.xlu0 %v1813, 64
        %v1833 = vpop.permute.xlu0 %1832
        %1834 = vrot.lane.b32.xlu0 %v1814, 64
        %v1835 = vpop.permute.xlu0 %1834
        %1836 = vrot.lane.b32.xlu0 %v1815, 64
        %v1837 = vpop.permute.xlu0 %1836
        %1838 = vrot.lane.b32.xlu0 %v1816, 64
        %v1839 = vpop.permute.xlu0 %1838
        %1840 = vrot.lane.b32.xlu0 %v1817, 64
        %v1841 = vpop.permute.xlu0 %1840
        %1842 = vrot.lane.b32.xlu0 %v1818, 64
        %v1843 = vpop.permute.xlu0 %1842
        %1844 = vrot.lane.b32.xlu0 %v1819, 64
        %v1845 = vpop.permute.xlu0 %1844
        %1846 = vrot.lane.b32.xlu0 %v1820, 64
        %v1847 = vpop.permute.xlu0 %1846
        %s1857 = scalar_lea.vmem %s167, 2160
        %1858 = vst.msk [vmem:[%s1857] sm:$0xff] %vm188, %v1831
        %1859 = vst.msk [vmem:[%s1857 + $0x8] sm:$0xff] %vm188, %v1833
        %1860 = vst.msk [vmem:[%s1857 + $0x10] sm:$0xff] %vm188, %v1835
        %1861 = vst.msk [vmem:[%s1857 + $0x18] sm:$0xff] %vm188, %v1837
        %1862 = vst.msk [vmem:[%s1857 + $0x20] sm:$0xff] %vm188, %v1839
        %1863 = vst.msk [vmem:[%s1857 + $0x28] sm:$0xff] %vm188, %v1841
        %1864 = vst.msk [vmem:[%s1857 + $0x30] sm:$0xff] %vm188, %v1843
        %1865 = vst.msk [vmem:[%s1857 + $0x38] sm:$0xff] %vm188, %v1845
        %1866 = vst.msk [vmem:[%s1857 + $0x40] sm:$0x1] %vm197, %v1847
        %v1867 = vld [vmem:[%s132 + $0x38] sm:$0xff]
        %v1868 = vld [vmem:[%s132 + $0x78] sm:$0xff]
        %v1869 = vld [vmem:[%s132 + $0xb8] sm:$0xff]
        %v1870 = vld [vmem:[%s132 + $0xf8] sm:$0xff]
        %v1871 = vld [vmem:[%s132 + $0x138] sm:$0xff]
        %v1872 = vld [vmem:[%s132 + $0x178] sm:$0xff]
        %v1873 = vld [vmem:[%s132 + $0x1b8] sm:$0xff]
        %v1874 = vld [vmem:[%s132 + $0x1f8] sm:$0xff]
        %v1875 = vld [vmem:[%s132 + $0x238] sm:$0x1]
        %v1876 = vmul.f32 %v1867, 0.17677669
        %v1877 = vmul.f32 %v1868, 0.17677669
        %v1878 = vmul.f32 %v1869, 0.17677669
        %v1879 = vmul.f32 %v1870, 0.17677669
        %v1880 = vmul.f32 %v1871, 0.17677669
        %v1881 = vmul.f32 %v1872, 0.17677669
        %v1882 = vmul.f32 %v1873, 0.17677669
        %v1883 = vmul.f32 %v1874, 0.17677669
        %v1884 = vmul.f32 %v1875, 0.17677669
        %1894 = vrot.lane.b32.xlu0 %v1876, 32
        %v1895 = vpop.permute.xlu0 %1894
        %1896 = vrot.lane.b32.xlu0 %v1877, 32
        %v1897 = vpop.permute.xlu0 %1896
        %1898 = vrot.lane.b32.xlu0 %v1878, 32
        %v1899 = vpop.permute.xlu0 %1898
        %1900 = vrot.lane.b32.xlu0 %v1879, 32
        %v1901 = vpop.permute.xlu0 %1900
        %1902 = vrot.lane.b32.xlu0 %v1880, 32
        %v1903 = vpop.permute.xlu0 %1902
        %1904 = vrot.lane.b32.xlu0 %v1881, 32
        %v1905 = vpop.permute.xlu0 %1904
        %1906 = vrot.lane.b32.xlu0 %v1882, 32
        %v1907 = vpop.permute.xlu0 %1906
        %1908 = vrot.lane.b32.xlu0 %v1883, 32
        %v1909 = vpop.permute.xlu0 %1908
        %1910 = vrot.lane.b32.xlu0 %v1884, 32
        %v1911 = vpop.permute.xlu0 %1910
        %s1921 = scalar_lea.vmem %s167, 2232
        %1922 = vst.msk [vmem:[%s1921] sm:$0xff] %vm188, %v1895
        %1923 = vst.msk [vmem:[%s1921 + $0x8] sm:$0xff] %vm188, %v1897
        %1924 = vst.msk [vmem:[%s1921 + $0x10] sm:$0xff] %vm188, %v1899
        %1925 = vst.msk [vmem:[%s1921 + $0x18] sm:$0xff] %vm188, %v1901
        %1926 = vst.msk [vmem:[%s1921 + $0x20] sm:$0xff] %vm188, %v1903
        %1927 = vst.msk [vmem:[%s1921 + $0x28] sm:$0xff] %vm188, %v1905
        %1928 = vst.msk [vmem:[%s1921 + $0x30] sm:$0xff] %vm188, %v1907
        %1929 = vst.msk [vmem:[%s1921 + $0x38] sm:$0xff] %vm188, %v1909
        %1930 = vst.msk [vmem:[%s1921 + $0x40] sm:$0x1] %vm197, %v1911
        %s1931 = smul.u32 8, %s19
        %s1932 = smul.u32 9, %s20
        %p1933 = scmp.lt.s32.totalorder %s1931, 31
        %s1934 = scalar_select %p1933, %s1931, 31
        %p1935 = scmp.lt.s32.totalorder %s1932, 8
        %s1936 = scalar_select %p1935, %s1932, 8
        %s1937 = smul.addr %s1934, 36
        %s1938 = sadd.s32 %s1936, %s1937
        %s1939 = smul.addr %s1938, 8
        %s1940 = scalar_lea.vmem %s1, %s1939
        // Predicated region
        $region29: #{tpu_custom_call.1} parent=23 // pred_check
          %p1941 = pneg %p75
        $region30: #{tpu_custom_call.1} parent=23 // pred_check_branch
          %1943 = sbr.rel (%p1941) target = $region32
        $region31: #{tpu_custom_call.1} parent=23 // pred_region
          %s1944 = smul.u32 8, %s19
          %s1945 = smul.u32 9, %s20
        $region32: #{tpu_custom_call.1} parent=23 // pred_fallthru
          _
      $region24: #{tpu_custom_call.1} parent=5 // pred_fallthru
        _
      %p1946 = scmp.le.s32.totalorder 2, %s10
      // Predicated region
      $region33: #{tpu_custom_call.1} parent=5 // pred_check
        %p1947 = pneg %p1946
      $region34: #{tpu_custom_call.1} parent=5 // pred_check_branch
        %1949 = sbr.rel (%p1947) target = $region36
      $region35: #{tpu_custom_call.1} parent=5 // pred_region
        %s1950 = ssub.s32 %s10, 2
        // Predicated region
        $region37: #{tpu_custom_call.1} parent=35 // pred_check
          %p1951 = pneg %p81
        $region38: #{tpu_custom_call.1} parent=35 // pred_check_branch
          %1953 = sbr.rel (%p1951) target = $region40
        $region39: #{tpu_custom_call.1} parent=35 // pred_region
          %s1954 = smul.u32 8, %s21
          %s1955 = smul.u32 9, %s22
          %p1956 = scmp.lt.s32.totalorder %s1954, 31
          %s1957 = scalar_select %p1956, %s1954, 31
          %p1958 = scmp.lt.s32.totalorder %s1955, 8
          %s1959 = scalar_select %p1958, %s1955, 8
          %s1960 = smul.addr %s1957, 36
          %s1961 = sadd.s32 %s1959, %s1960
          %s1962 = smul.addr %s1961, 8
          %s1963 = scalar_lea.vmem %s1, %s1962
        $region40: #{tpu_custom_call.1} parent=35 // pred_fallthru
          _
      $region36: #{tpu_custom_call.1} parent=5 // pred_fallthru
        _
    $region6: #{tpu_custom_call.1} parent=1 // loop_footer
      %s14 = sadd.s32 1, %s10
    $region7: #{tpu_custom_call.1} parent=1 // loop_footer_branch
      %9 = sbr.rel target = $region3
    $region8: #{tpu_custom_call.1} parent=1 // loop_exit
      _
    %1964 = vsyncpa [#allocation3], 1
    %s1965 = scalar_lea.sflag [#allocation3], 1
    %1966 = vsyncpa %s1965, 1

</llo_original>
